<compile_context>
chip_gen: v5e
topology: v5e:2x2
jax: 0.10.0
libtpu: 0.0.40
codegen_flags: <defaults>
</compile_context>

<pallas_src>
import functools

import numpy as np
import jax
import jax.numpy as jnp
from jax import lax
from jax.experimental import pallas as pl
from jax.experimental.pallas import tpu as pltpu

_EPS = 1e-5


# ---------------------------------------------------------------------------
# fused kernel: whole StaticEmbedding forward, residual stream resident in VMEM
# ---------------------------------------------------------------------------
def fused_static_embedding_kernel(
        x_ref,                                        # (R, Cin), R = B*L
        w1s_ref, gs_ref, bs_ref, w2s_ref, b2s_ref,    # 4 rest blocks (stacked)
        mt_ref, bfc_ref,                              # SPP+fc folded: (L, L), (L, 1)
        cw1_ref, cg_ref, cb_ref, cw2_ref, cb2_ref,    # final cnn block
        out_ref,                                      # (R, d_model)
        *, B, L, n_rest):
    R = B * L
    inv_n = 1.0 / float(R)

    # Batch-boundary masks: conv padding must not leak across batch elements.
    row = lax.broadcasted_iota(jnp.int32, (R, 1), 0)
    is_first = (row % L) == 0
    is_last = (row % L) == (L - 1)
    ones_row = jnp.ones((1, R), jnp.float32)          # hoisted; reused by every BN

    def im2col3(h):
        """(R, C) -> (R, 3C) = [h[t-1], h[t], h[t+1]] with per-batch zero padding."""
        prev = jnp.where(is_first, 0.0, pltpu.roll(h, shift=1, axis=0))
        nxt = jnp.where(is_last, 0.0, pltpu.roll(h, shift=R - 1, axis=0))
        return jnp.concatenate([prev, h, nxt], axis=1)

    def conv3(h, w2d):
        """3-tap 'same' Conv1d as a single MXU matmul (R, 3C) @ (3C, Cout)."""
        return jnp.dot(im2col3(h), w2d, preferred_element_type=jnp.float32)

    def bn_relu(u, gamma, beta):
        """Training-mode BatchNorm1d (stats over B*L rows, biased var) + ReLU.
        Row reductions as ones-row MXU matmuls; centered variance for stability."""
        mean = jnp.dot(ones_row, u, preferred_element_type=jnp.float32) * inv_n
        d = u - mean
        var = jnp.dot(ones_row, d * d, preferred_element_type=jnp.float32) * inv_n
        return jnp.maximum(d * (gamma * lax.rsqrt(var + _EPS)) + beta, 0.0)

    h = x_ref[...]                                    # (R, Cin), f32

    # 4 residual conv blocks.  conv1 bias dropped: it cancels exactly in
    # training-mode BN (shifts activations and batch mean identically).
    for i in range(n_rest):
        t = bn_relu(conv3(h, w1s_ref[i]), gs_ref[i], bs_ref[i])
        h = h + conv3(t, w2s_ref[i]) + b2s_ref[i]

    # SPP (adaptive avg pools 1/4/9/16) + Linear(30, num_node) + ReLU + residual,
    # folded into one (L, L) matrix per batch element (module requires num_node == L).
    spp_parts = []
    for b in range(B):                                # static unroll, 8-aligned slices
        hb = h[b * L:(b + 1) * L]
        spp_parts.append(
            jnp.dot(mt_ref[...], hb, preferred_element_type=jnp.float32) + bfc_ref[...])
    h = h + jnp.maximum(jnp.concatenate(spp_parts, axis=0), 0.0)

    # Final cnn block (no residual); output is lane-dense (R, d_model).
    t = bn_relu(conv3(h, cw1_ref[...]), cg_ref[...], cb_ref[...])
    out = conv3(t, cw2_ref[...]) + cb2_ref[...]
    out_ref[...] = out.astype(out_ref.dtype)


# ---------------------------------------------------------------------------
# pallas_call wrapper
# ---------------------------------------------------------------------------
def _full_spec(shape):
    n = len(shape)
    return pl.BlockSpec(tuple(shape), lambda i, _n=n: (0,) * _n)


def static_embedding_forward(x, params):
    """x: (B, L, sta_in) -> (B, L, d_model) via one fused Pallas call."""
    B, L, Cin = x.shape
    d_model = params["cw2"].shape[1]
    R = B * L
    x2 = x.reshape(R, Cin).astype(jnp.float32)

    args = [x2,
            params["w1s"], params["gs"], params["bs"], params["w2s"], params["b2s"],
            params["mt"], params["bfc"],
            params["cw1"], params["cg"], params["cbeta"], params["cw2"], params["cb2"]]
    kern = functools.partial(fused_static_embedding_kernel,
                             B=B, L=L, n_rest=params["w1s"].shape[0])
    out = pl.pallas_call(
        kern,
        out_shape=jax.ShapeDtypeStruct((R, d_model), jnp.float32),
        grid=(1,),
        in_specs=[_full_spec(a.shape) for a in args],
        out_specs=pl.BlockSpec((R, d_model), lambda i: (0, 0)),
        compiler_params=pltpu.CompilerParams(dimension_semantics=("arbitrary",)),
    )(*args)
    return out.reshape(B, L, d_model)


# ---------------------------------------------------------------------------
# host-side parameter preparation
# ---------------------------------------------------------------------------
def _adaptive_pool_matrix(L, sizes=(1, 4, 9, 16)):
    """Exact AdaptiveAvgPool1d(sizes) as one (L, sum(sizes)) pooling matrix."""
    cols = []
    for out in sizes:
        P = np.zeros((L, out), np.float32)
        for j in range(out):
            s = (j * L) // out
            e = -((-(j + 1) * L) // out)              # ceil((j+1)*L/out)
            P[s:e, j] = 1.0 / (e - s)
        cols.append(P)
    return np.concatenate(cols, axis=1)


def _prepare_params(raw):
    """PyTorch-layout weights -> fused-kernel layout (im2col rows, channels-last)."""
    def wk(w):                                        # (Cout, Cin, 3) -> (3*Cin, Cout)
        w = jnp.transpose(w, (2, 1, 0)).astype(jnp.float32)
        return w.reshape(w.shape[0] * w.shape[1], w.shape[2])

    f32 = lambda a: jnp.asarray(a, jnp.float32)
    rest = raw["rest"]
    params = dict(
        w1s=jnp.stack([wk(b["w1"]) for b in rest]),                  # (4, 3*Cin, 64)
        gs=jnp.stack([f32(b["gamma"]).reshape(1, -1) for b in rest]),
        bs=jnp.stack([f32(b["beta"]).reshape(1, -1) for b in rest]),
        w2s=jnp.stack([wk(b["w2"]) for b in rest]),                  # (4, 3*64, Cin)
        b2s=jnp.stack([f32(b["b2"]).reshape(1, -1) for b in rest]),
    )
    L = raw["num_node"]
    P = jnp.asarray(_adaptive_pool_matrix(L))                        # (L, 30)
    params["mt"] = f32(raw["fc_w"]) @ P.T                            # (L, L)
    params["bfc"] = f32(raw["fc_b"]).reshape(-1, 1)                  # (L, 1)
    cnn = raw["cnn"]
    params.update(cw1=wk(cnn["w1"]), cg=f32(cnn["gamma"]).reshape(1, -1),
                  cbeta=f32(cnn["beta"]).reshape(1, -1),
                  cw2=wk(cnn["w2"]), cb2=f32(cnn["b2"]).reshape(1, -1))
    return params


# ---------------------------------------------------------------------------
# pure-JAX reference mirroring the PyTorch module
# ---------------------------------------------------------------------------
def ref_forward(x, raw):
    def conv1d(u, w, b):
        y = lax.conv_general_dilated(u, w, (1,), [(1, 1)],
                                     dimension_numbers=("NCH", "OIH", "NCH"))
        return y + b[None, :, None]

    def bn_train(u, gamma, beta):
        mean = u.mean(axis=(0, 2), keepdims=True)
        var = ((u - mean) ** 2).mean(axis=(0, 2), keepdims=True)
        return ((u - mean) * lax.rsqrt(var + _EPS) * gamma[None, :, None]
                + beta[None, :, None])

    h = jnp.transpose(x, (0, 2, 1))                                  # (B, C, L)
    for blk in raw["rest"]:
        u = conv1d(h, blk["w1"], blk["b1"])
        u = jnp.maximum(bn_train(u, blk["gamma"], blk["beta"]), 0.0)
        h = h + conv1d(u, blk["w2"], blk["b2"])
    L = h.shape[2]
    pools = []
    for out_sz in (1, 4, 9, 16):
        cols = []
        for j in range(out_sz):
            s = (j * L) // out_sz
            e = -((-(j + 1) * L) // out_sz)
            cols.append(h[:, :, s:e].mean(axis=2, keepdims=True))
        pools.append(jnp.concatenate(cols, axis=2))
    spp = jnp.concatenate(pools, axis=2)                             # (B, C, 30)
    spp = jnp.maximum(jnp.einsum("bcj,nj->bcn", spp, raw["fc_w"]) + raw["fc_b"], 0.0)
    h = h + spp
    cnn = raw["cnn"]
    u = conv1d(h, cnn["w1"], cnn["b1"])
    u = jnp.maximum(bn_train(u, cnn["gamma"], cnn["beta"]), 0.0)
    u = conv1d(u, cnn["w2"], cnn["b2"])
    return jnp.transpose(u, (0, 2, 1))


if __name__ == "__main__":
    B, L, sta_in, d_model, H = 2, 16, 4, 128, 64      # num_node == L (module requires it)

    key = jax.random.PRNGKey(0)
    keys = iter(jax.random.split(key, 40))

    def conv_w(k, cout, cin):
        return jax.random.normal(k, (cout, cin, 3), jnp.float32) / np.sqrt(cin * 3.0)

    raw = dict(rest=[], num_node=L)
    for _ in range(4):
        raw["rest"].append(dict(
            w1=conv_w(next(keys), H, sta_in),
            b1=0.1 * jax.random.normal(next(keys), (H,), jnp.float32),
            gamma=1.0 + 0.1 * jax.random.normal(next(keys), (H,), jnp.float32),
            beta=0.1 * jax.random.normal(next(keys), (H,), jnp.float32),
            w2=conv_w(next(keys), sta_in, H),
            b2=0.1 * jax.random.normal(next(keys), (sta_in,), jnp.float32)))
    raw["fc_w"] = jax.random.normal(next(keys), (L, 30), jnp.float32) / np.sqrt(30.0)
    raw["fc_b"] = 0.1 * jax.random.normal(next(keys), (L,), jnp.float32)
    raw["cnn"] = dict(
        w1=conv_w(next(keys), H, sta_in),
        b1=0.1 * jax.random.normal(next(keys), (H,), jnp.float32),
        gamma=1.0 + 0.1 * jax.random.normal(next(keys), (H,), jnp.float32),
        beta=0.1 * jax.random.normal(next(keys), (H,), jnp.float32),
        w2=conv_w(next(keys), d_model, H),
        b2=0.1 * jax.random.normal(next(keys), (d_model,), jnp.float32))

    x = jax.random.normal(next(keys), (B, L, sta_in), jnp.float32)

    params = _prepare_params(raw)
    out = jax.jit(static_embedding_forward)(x, params)
    out = jax.block_until_ready(out)

    ref = ref_forward(x, raw)
    assert out.shape == (B, L, d_model)
    max_err = float(jnp.max(jnp.abs(out - ref)))
    assert jnp.allclose(out, ref, atol=1e-3, rtol=1e-3), max_err
    print("KERNEL_OK")
</pallas_src>

<mosaic_0001>
module attributes {stable_mosaic.version = 11 : i64} {
  func.func @fused_static_embedding_kernel(%arg0: i32, %arg1: memref<32x4xf32, #tpu.memory_space<vmem>>, %arg2: memref<4x12x64xf32, #tpu.memory_space<vmem>>, %arg3: memref<4x1x64xf32, #tpu.memory_space<vmem>>, %arg4: memref<4x1x64xf32, #tpu.memory_space<vmem>>, %arg5: memref<4x192x4xf32, #tpu.memory_space<vmem>>, %arg6: memref<4x1x4xf32, #tpu.memory_space<vmem>>, %arg7: memref<16x16xf32, #tpu.memory_space<vmem>>, %arg8: memref<16x1xf32, #tpu.memory_space<vmem>>, %arg9: memref<12x64xf32, #tpu.memory_space<vmem>>, %arg10: memref<1x64xf32, #tpu.memory_space<vmem>>, %arg11: memref<1x64xf32, #tpu.memory_space<vmem>>, %arg12: memref<192x128xf32, #tpu.memory_space<vmem>>, %arg13: memref<1x128xf32, #tpu.memory_space<vmem>>, %arg14: memref<32x128xf32, #tpu.memory_space<vmem>>) attributes {dimension_semantics = [#tpu.dimension_semantics<arbitrary>], iteration_bounds = array<i64: 1>, scalar_prefetch = 0 : i64, scratch_operands = 0 : i64, tpu.core_type = #tpu.core_type<tc>, window_params = [{pipeline_mode = #tpu.pipeline_mode<synchronous>, transform_indices = @transform_0, window_bounds = array<i64: 32, 4>}, {pipeline_mode = #tpu.pipeline_mode<synchronous>, transform_indices = @transform_1, window_bounds = array<i64: 4, 12, 64>}, {pipeline_mode = #tpu.pipeline_mode<synchronous>, transform_indices = @transform_2, window_bounds = array<i64: 4, 1, 64>}, {pipeline_mode = #tpu.pipeline_mode<synchronous>, transform_indices = @transform_3, window_bounds = array<i64: 4, 1, 64>}, {pipeline_mode = #tpu.pipeline_mode<synchronous>, transform_indices = @transform_4, window_bounds = array<i64: 4, 192, 4>}, {pipeline_mode = #tpu.pipeline_mode<synchronous>, transform_indices = @transform_5, window_bounds = array<i64: 4, 1, 4>}, {pipeline_mode = #tpu.pipeline_mode<synchronous>, transform_indices = @transform_6, window_bounds = array<i64: 16, 16>}, {pipeline_mode = #tpu.pipeline_mode<synchronous>, transform_indices = @transform_7, window_bounds = array<i64: 16, 1>}, {pipeline_mode = #tpu.pipeline_mode<synchronous>, transform_indices = @transform_8, window_bounds = array<i64: 12, 64>}, {pipeline_mode = #tpu.pipeline_mode<synchronous>, transform_indices = @transform_9, window_bounds = array<i64: 1, 64>}, {pipeline_mode = #tpu.pipeline_mode<synchronous>, transform_indices = @transform_10, window_bounds = array<i64: 1, 64>}, {pipeline_mode = #tpu.pipeline_mode<synchronous>, transform_indices = @transform_11, window_bounds = array<i64: 192, 128>}, {pipeline_mode = #tpu.pipeline_mode<synchronous>, transform_indices = @transform_12, window_bounds = array<i64: 1, 128>}, {pipeline_mode = #tpu.pipeline_mode<synchronous>, transform_indices = @transform_13, window_bounds = array<i64: 32, 128>}]} {
    %0 = tpu.iota {dimensions = array<i32: 0>} : vector<32x1xi32>
    %c16_i32 = arith.constant 16 : i32
    %c0_i32 = arith.constant 0 : i32
    %1 = arith.cmpi eq, %c16_i32, %c0_i32 : i32
    %c1_i32 = arith.constant 1 : i32
    %2 = arith.select %1, %c1_i32, %c16_i32 : i32
    %3 = vector.broadcast %2 : i32 to vector<32x1xi32>
    %4 = arith.remsi %0, %3 : vector<32x1xi32>
    %c0_i32_0 = arith.constant 0 : i32
    %5 = vector.broadcast %c0_i32_0 : i32 to vector<32x1xi32>
    %6 = arith.cmpi ne, %4, %5 : vector<32x1xi32>
    %c0_i32_1 = arith.constant 0 : i32
    %7 = vector.broadcast %c0_i32_1 : i32 to vector<32x1xi32>
    %8 = arith.cmpi slt, %4, %7 : vector<32x1xi32>
    %c0_i32_2 = arith.constant 0 : i32
    %9 = arith.cmpi slt, %2, %c0_i32_2 : i32
    %10 = vector.broadcast %9 : i1 to vector<32x1xi1>
    %11 = vector.broadcast %10 : vector<32x1xi1> to vector<32x1xi1>
    %12 = arith.xori %8, %11 : vector<32x1xi1>
    %13 = arith.andi %12, %6 : vector<32x1xi1>
    %14 = vector.broadcast %2 : i32 to vector<32x1xi32>
    %15 = arith.addi %4, %14 : vector<32x1xi32>
    %16 = arith.select %13, %15, %4 : vector<32x1xi1>, vector<32x1xi32>
    %c0_i32_3 = arith.constant 0 : i32
    %17 = vector.broadcast %c0_i32_3 : i32 to vector<32x1xi32>
    %18 = arith.cmpi eq, %16, %17 : vector<32x1xi32>
    %c16_i32_4 = arith.constant 16 : i32
    %c0_i32_5 = arith.constant 0 : i32
    %19 = arith.cmpi eq, %c16_i32_4, %c0_i32_5 : i32
    %c1_i32_6 = arith.constant 1 : i32
    %20 = arith.select %19, %c1_i32_6, %c16_i32_4 : i32
    %21 = vector.broadcast %20 : i32 to vector<32x1xi32>
    %22 = arith.remsi %0, %21 : vector<32x1xi32>
    %c0_i32_7 = arith.constant 0 : i32
    %23 = vector.broadcast %c0_i32_7 : i32 to vector<32x1xi32>
    %24 = arith.cmpi ne, %22, %23 : vector<32x1xi32>
    %c0_i32_8 = arith.constant 0 : i32
    %25 = vector.broadcast %c0_i32_8 : i32 to vector<32x1xi32>
    %26 = arith.cmpi slt, %22, %25 : vector<32x1xi32>
    %c0_i32_9 = arith.constant 0 : i32
    %27 = arith.cmpi slt, %20, %c0_i32_9 : i32
    %28 = vector.broadcast %27 : i1 to vector<32x1xi1>
    %29 = vector.broadcast %28 : vector<32x1xi1> to vector<32x1xi1>
    %30 = arith.xori %26, %29 : vector<32x1xi1>
    %31 = arith.andi %30, %24 : vector<32x1xi1>
    %32 = vector.broadcast %20 : i32 to vector<32x1xi32>
    %33 = arith.addi %22, %32 : vector<32x1xi32>
    %34 = arith.select %31, %33, %22 : vector<32x1xi1>, vector<32x1xi32>
    %c15_i32 = arith.constant 15 : i32
    %35 = vector.broadcast %c15_i32 : i32 to vector<32x1xi32>
    %36 = arith.cmpi eq, %34, %35 : vector<32x1xi32>
    %cst = arith.constant 1.000000e+00 : f32
    %37 = vector.broadcast %cst : f32 to vector<1x32xf32>
    %c0 = arith.constant 0 : index
    %c0_10 = arith.constant 0 : index
    %38 = vector.load %arg1[%c0, %c0_10] : memref<32x4xf32, #tpu.memory_space<vmem>>, vector<32x4xf32>
    %c0_11 = arith.constant 0 : index
    %c0_12 = arith.constant 0 : index
    %c0_13 = arith.constant 0 : index
    %39 = vector.load %arg2[%c0_11, %c0_12, %c0_13] : memref<4x12x64xf32, #tpu.memory_space<vmem>>, vector<1x12x64xf32>
    %40 = vector.shape_cast %39 : vector<1x12x64xf32> to vector<12x64xf32>
    %c1_i32_14 = arith.constant 1 : i32
    %41 = tpu.dynamic_rotate %38 by %c1_i32_14 dim 0 : vector<32x4xf32>, i32 -> vector<32x4xf32>
    %cst_15 = arith.constant 0.000000e+00 : f32
    %42 = vector.shape_cast %18 : vector<32x1xi1> to vector<32x1xi1>
    %43 = vector.broadcast %42 : vector<32x1xi1> to vector<32x4xi1>
    %44 = vector.broadcast %cst_15 : f32 to vector<32x4xf32>
    %45 = arith.select %43, %44, %41 : vector<32x4xi1>, vector<32x4xf32>
    %c31_i32 = arith.constant 31 : i32
    %46 = tpu.dynamic_rotate %38 by %c31_i32 dim 0 : vector<32x4xf32>, i32 -> vector<32x4xf32>
    %cst_16 = arith.constant 0.000000e+00 : f32
    %47 = vector.shape_cast %36 : vector<32x1xi1> to vector<32x1xi1>
    %48 = vector.broadcast %47 : vector<32x1xi1> to vector<32x4xi1>
    %49 = vector.broadcast %cst_16 : f32 to vector<32x4xf32>
    %50 = arith.select %48, %49, %46 : vector<32x4xi1>, vector<32x4xf32>
    %51 = tpu.concatenate %45, %38, %50 in 1 : vector<32x4xf32>, vector<32x4xf32>, vector<32x4xf32> -> vector<32x12xf32>
    %cst_17 = arith.constant dense<0.000000e+00> : vector<32x64xf32>
    %52 = tpu.matmul %51, %40, %cst_17 {dimension_numbers = #tpu.dot_dimension_numbers<[1], [0], [0], [1], [0, 0, 1, 1], [], []>} : vector<32x12xf32>, vector<12x64xf32>, vector<32x64xf32> -> vector<32x64xf32>
    %c0_18 = arith.constant 0 : index
    %c0_19 = arith.constant 0 : index
    %c0_20 = arith.constant 0 : index
    %53 = vector.load %arg3[%c0_18, %c0_19, %c0_20] : memref<4x1x64xf32, #tpu.memory_space<vmem>>, vector<1x1x64xf32>
    %54 = vector.shape_cast %53 : vector<1x1x64xf32> to vector<1x64xf32>
    %c0_21 = arith.constant 0 : index
    %c0_22 = arith.constant 0 : index
    %c0_23 = arith.constant 0 : index
    %55 = vector.load %arg4[%c0_21, %c0_22, %c0_23] : memref<4x1x64xf32, #tpu.memory_space<vmem>>, vector<1x1x64xf32>
    %56 = vector.shape_cast %55 : vector<1x1x64xf32> to vector<1x64xf32>
    %cst_24 = arith.constant dense<0.000000e+00> : vector<1x64xf32>
    %57 = tpu.matmul %37, %52, %cst_24 {dimension_numbers = #tpu.dot_dimension_numbers<[1], [0], [0], [1], [0, 0, 1, 1], [], []>} : vector<1x32xf32>, vector<32x64xf32>, vector<1x64xf32> -> vector<1x64xf32>
    %cst_25 = arith.constant 3.125000e-02 : f32
    %58 = vector.broadcast %cst_25 : f32 to vector<1x64xf32>
    %59 = arith.mulf %57, %58 : vector<1x64xf32>
    %60 = vector.broadcast %59 : vector<1x64xf32> to vector<32x64xf32>
    %61 = arith.subf %52, %60 : vector<32x64xf32>
    %62 = arith.mulf %61, %61 : vector<32x64xf32>
    %cst_26 = arith.constant dense<0.000000e+00> : vector<1x64xf32>
    %63 = tpu.matmul %37, %62, %cst_26 {dimension_numbers = #tpu.dot_dimension_numbers<[1], [0], [0], [1], [0, 0, 1, 1], [], []>} : vector<1x32xf32>, vector<32x64xf32>, vector<1x64xf32> -> vector<1x64xf32>
    %cst_27 = arith.constant 3.125000e-02 : f32
    %64 = vector.broadcast %cst_27 : f32 to vector<1x64xf32>
    %65 = arith.mulf %63, %64 : vector<1x64xf32>
    %cst_28 = arith.constant 9.99999974E-6 : f32
    %66 = vector.broadcast %cst_28 : f32 to vector<1x64xf32>
    %67 = arith.addf %65, %66 : vector<1x64xf32>
    %68 = math.rsqrt %67 : vector<1x64xf32>
    %69 = arith.mulf %54, %68 : vector<1x64xf32>
    %70 = vector.broadcast %69 : vector<1x64xf32> to vector<32x64xf32>
    %71 = arith.mulf %61, %70 : vector<32x64xf32>
    %72 = vector.broadcast %56 : vector<1x64xf32> to vector<32x64xf32>
    %73 = arith.addf %71, %72 : vector<32x64xf32>
    %cst_29 = arith.constant 0.000000e+00 : f32
    %74 = vector.broadcast %cst_29 : f32 to vector<32x64xf32>
    %75 = arith.maximumf %73, %74 : vector<32x64xf32>
    %c0_30 = arith.constant 0 : index
    %c0_31 = arith.constant 0 : index
    %c0_32 = arith.constant 0 : index
    %76 = vector.load %arg5[%c0_30, %c0_31, %c0_32] : memref<4x192x4xf32, #tpu.memory_space<vmem>>, vector<1x192x4xf32>
    %77 = vector.shape_cast %76 : vector<1x192x4xf32> to vector<192x4xf32>
    %c1_i32_33 = arith.constant 1 : i32
    %78 = tpu.dynamic_rotate %75 by %c1_i32_33 dim 0 : vector<32x64xf32>, i32 -> vector<32x64xf32>
    %cst_34 = arith.constant 0.000000e+00 : f32
    %79 = vector.shape_cast %18 : vector<32x1xi1> to vector<32x1xi1>
    %80 = vector.broadcast %79 : vector<32x1xi1> to vector<32x64xi1>
    %81 = vector.broadcast %cst_34 : f32 to vector<32x64xf32>
    %82 = arith.select %80, %81, %78 : vector<32x64xi1>, vector<32x64xf32>
    %c31_i32_35 = arith.constant 31 : i32
    %83 = tpu.dynamic_rotate %75 by %c31_i32_35 dim 0 : vector<32x64xf32>, i32 -> vector<32x64xf32>
    %cst_36 = arith.constant 0.000000e+00 : f32
    %84 = vector.shape_cast %36 : vector<32x1xi1> to vector<32x1xi1>
    %85 = vector.broadcast %84 : vector<32x1xi1> to vector<32x64xi1>
    %86 = vector.broadcast %cst_36 : f32 to vector<32x64xf32>
    %87 = arith.select %85, %86, %83 : vector<32x64xi1>, vector<32x64xf32>
    %88 = tpu.concatenate %82, %75, %87 in 1 : vector<32x64xf32>, vector<32x64xf32>, vector<32x64xf32> -> vector<32x192xf32>
    %cst_37 = arith.constant dense<0.000000e+00> : vector<32x4xf32>
    %89 = tpu.matmul %88, %77, %cst_37 {dimension_numbers = #tpu.dot_dimension_numbers<[1], [0], [0], [1], [0, 0, 1, 1], [], []>} : vector<32x192xf32>, vector<192x4xf32>, vector<32x4xf32> -> vector<32x4xf32>
    %90 = arith.addf %38, %89 : vector<32x4xf32>
    %c0_38 = arith.constant 0 : index
    %c0_39 = arith.constant 0 : index
    %c0_40 = arith.constant 0 : index
    %91 = vector.load %arg6[%c0_38, %c0_39, %c0_40] : memref<4x1x4xf32, #tpu.memory_space<vmem>>, vector<1x1x4xf32>
    %92 = vector.shape_cast %91 : vector<1x1x4xf32> to vector<1x4xf32>
    %93 = vector.broadcast %92 : vector<1x4xf32> to vector<32x4xf32>
    %94 = arith.addf %90, %93 : vector<32x4xf32>
    %c1 = arith.constant 1 : index
    %c0_41 = arith.constant 0 : index
    %c0_42 = arith.constant 0 : index
    %95 = vector.load %arg2[%c1, %c0_41, %c0_42] : memref<4x12x64xf32, #tpu.memory_space<vmem>>, vector<1x12x64xf32>
    %96 = vector.shape_cast %95 : vector<1x12x64xf32> to vector<12x64xf32>
    %c1_i32_43 = arith.constant 1 : i32
    %97 = tpu.dynamic_rotate %94 by %c1_i32_43 dim 0 : vector<32x4xf32>, i32 -> vector<32x4xf32>
    %cst_44 = arith.constant 0.000000e+00 : f32
    %98 = vector.shape_cast %18 : vector<32x1xi1> to vector<32x1xi1>
    %99 = vector.broadcast %98 : vector<32x1xi1> to vector<32x4xi1>
    %100 = vector.broadcast %cst_44 : f32 to vector<32x4xf32>
    %101 = arith.select %99, %100, %97 : vector<32x4xi1>, vector<32x4xf32>
    %c31_i32_45 = arith.constant 31 : i32
    %102 = tpu.dynamic_rotate %94 by %c31_i32_45 dim 0 : vector<32x4xf32>, i32 -> vector<32x4xf32>
    %cst_46 = arith.constant 0.000000e+00 : f32
    %103 = vector.shape_cast %36 : vector<32x1xi1> to vector<32x1xi1>
    %104 = vector.broadcast %103 : vector<32x1xi1> to vector<32x4xi1>
    %105 = vector.broadcast %cst_46 : f32 to vector<32x4xf32>
    %106 = arith.select %104, %105, %102 : vector<32x4xi1>, vector<32x4xf32>
    %107 = tpu.concatenate %101, %94, %106 in 1 : vector<32x4xf32>, vector<32x4xf32>, vector<32x4xf32> -> vector<32x12xf32>
    %cst_47 = arith.constant dense<0.000000e+00> : vector<32x64xf32>
    %108 = tpu.matmul %107, %96, %cst_47 {dimension_numbers = #tpu.dot_dimension_numbers<[1], [0], [0], [1], [0, 0, 1, 1], [], []>} : vector<32x12xf32>, vector<12x64xf32>, vector<32x64xf32> -> vector<32x64xf32>
    %c1_48 = arith.constant 1 : index
    %c0_49 = arith.constant 0 : index
    %c0_50 = arith.constant 0 : index
    %109 = vector.load %arg3[%c1_48, %c0_49, %c0_50] : memref<4x1x64xf32, #tpu.memory_space<vmem>>, vector<1x1x64xf32>
    %110 = vector.shape_cast %109 : vector<1x1x64xf32> to vector<1x64xf32>
    %c1_51 = arith.constant 1 : index
    %c0_52 = arith.constant 0 : index
    %c0_53 = arith.constant 0 : index
    %111 = vector.load %arg4[%c1_51, %c0_52, %c0_53] : memref<4x1x64xf32, #tpu.memory_space<vmem>>, vector<1x1x64xf32>
    %112 = vector.shape_cast %111 : vector<1x1x64xf32> to vector<1x64xf32>
    %cst_54 = arith.constant dense<0.000000e+00> : vector<1x64xf32>
    %113 = tpu.matmul %37, %108, %cst_54 {dimension_numbers = #tpu.dot_dimension_numbers<[1], [0], [0], [1], [0, 0, 1, 1], [], []>} : vector<1x32xf32>, vector<32x64xf32>, vector<1x64xf32> -> vector<1x64xf32>
    %cst_55 = arith.constant 3.125000e-02 : f32
    %114 = vector.broadcast %cst_55 : f32 to vector<1x64xf32>
    %115 = arith.mulf %113, %114 : vector<1x64xf32>
    %116 = vector.broadcast %115 : vector<1x64xf32> to vector<32x64xf32>
    %117 = arith.subf %108, %116 : vector<32x64xf32>
    %118 = arith.mulf %117, %117 : vector<32x64xf32>
    %cst_56 = arith.constant dense<0.000000e+00> : vector<1x64xf32>
    %119 = tpu.matmul %37, %118, %cst_56 {dimension_numbers = #tpu.dot_dimension_numbers<[1], [0], [0], [1], [0, 0, 1, 1], [], []>} : vector<1x32xf32>, vector<32x64xf32>, vector<1x64xf32> -> vector<1x64xf32>
    %cst_57 = arith.constant 3.125000e-02 : f32
    %120 = vector.broadcast %cst_57 : f32 to vector<1x64xf32>
    %121 = arith.mulf %119, %120 : vector<1x64xf32>
    %cst_58 = arith.constant 9.99999974E-6 : f32
    %122 = vector.broadcast %cst_58 : f32 to vector<1x64xf32>
    %123 = arith.addf %121, %122 : vector<1x64xf32>
    %124 = math.rsqrt %123 : vector<1x64xf32>
    %125 = arith.mulf %110, %124 : vector<1x64xf32>
    %126 = vector.broadcast %125 : vector<1x64xf32> to vector<32x64xf32>
    %127 = arith.mulf %117, %126 : vector<32x64xf32>
    %128 = vector.broadcast %112 : vector<1x64xf32> to vector<32x64xf32>
    %129 = arith.addf %127, %128 : vector<32x64xf32>
    %cst_59 = arith.constant 0.000000e+00 : f32
    %130 = vector.broadcast %cst_59 : f32 to vector<32x64xf32>
    %131 = arith.maximumf %129, %130 : vector<32x64xf32>
    %c1_60 = arith.constant 1 : index
    %c0_61 = arith.constant 0 : index
    %c0_62 = arith.constant 0 : index
    %132 = vector.load %arg5[%c1_60, %c0_61, %c0_62] : memref<4x192x4xf32, #tpu.memory_space<vmem>>, vector<1x192x4xf32>
    %133 = vector.shape_cast %132 : vector<1x192x4xf32> to vector<192x4xf32>
    %c1_i32_63 = arith.constant 1 : i32
    %134 = tpu.dynamic_rotate %131 by %c1_i32_63 dim 0 : vector<32x64xf32>, i32 -> vector<32x64xf32>
    %cst_64 = arith.constant 0.000000e+00 : f32
    %135 = vector.shape_cast %18 : vector<32x1xi1> to vector<32x1xi1>
    %136 = vector.broadcast %135 : vector<32x1xi1> to vector<32x64xi1>
    %137 = vector.broadcast %cst_64 : f32 to vector<32x64xf32>
    %138 = arith.select %136, %137, %134 : vector<32x64xi1>, vector<32x64xf32>
    %c31_i32_65 = arith.constant 31 : i32
    %139 = tpu.dynamic_rotate %131 by %c31_i32_65 dim 0 : vector<32x64xf32>, i32 -> vector<32x64xf32>
    %cst_66 = arith.constant 0.000000e+00 : f32
    %140 = vector.shape_cast %36 : vector<32x1xi1> to vector<32x1xi1>
    %141 = vector.broadcast %140 : vector<32x1xi1> to vector<32x64xi1>
    %142 = vector.broadcast %cst_66 : f32 to vector<32x64xf32>
    %143 = arith.select %141, %142, %139 : vector<32x64xi1>, vector<32x64xf32>
    %144 = tpu.concatenate %138, %131, %143 in 1 : vector<32x64xf32>, vector<32x64xf32>, vector<32x64xf32> -> vector<32x192xf32>
    %cst_67 = arith.constant dense<0.000000e+00> : vector<32x4xf32>
    %145 = tpu.matmul %144, %133, %cst_67 {dimension_numbers = #tpu.dot_dimension_numbers<[1], [0], [0], [1], [0, 0, 1, 1], [], []>} : vector<32x192xf32>, vector<192x4xf32>, vector<32x4xf32> -> vector<32x4xf32>
    %146 = arith.addf %94, %145 : vector<32x4xf32>
    %c1_68 = arith.constant 1 : index
    %c0_69 = arith.constant 0 : index
    %c0_70 = arith.constant 0 : index
    %147 = vector.load %arg6[%c1_68, %c0_69, %c0_70] : memref<4x1x4xf32, #tpu.memory_space<vmem>>, vector<1x1x4xf32>
    %148 = vector.shape_cast %147 : vector<1x1x4xf32> to vector<1x4xf32>
    %149 = vector.broadcast %148 : vector<1x4xf32> to vector<32x4xf32>
    %150 = arith.addf %146, %149 : vector<32x4xf32>
    %c2 = arith.constant 2 : index
    %c0_71 = arith.constant 0 : index
    %c0_72 = arith.constant 0 : index
    %151 = vector.load %arg2[%c2, %c0_71, %c0_72] : memref<4x12x64xf32, #tpu.memory_space<vmem>>, vector<1x12x64xf32>
    %152 = vector.shape_cast %151 : vector<1x12x64xf32> to vector<12x64xf32>
    %c1_i32_73 = arith.constant 1 : i32
    %153 = tpu.dynamic_rotate %150 by %c1_i32_73 dim 0 : vector<32x4xf32>, i32 -> vector<32x4xf32>
    %cst_74 = arith.constant 0.000000e+00 : f32
    %154 = vector.shape_cast %18 : vector<32x1xi1> to vector<32x1xi1>
    %155 = vector.broadcast %154 : vector<32x1xi1> to vector<32x4xi1>
    %156 = vector.broadcast %cst_74 : f32 to vector<32x4xf32>
    %157 = arith.select %155, %156, %153 : vector<32x4xi1>, vector<32x4xf32>
    %c31_i32_75 = arith.constant 31 : i32
    %158 = tpu.dynamic_rotate %150 by %c31_i32_75 dim 0 : vector<32x4xf32>, i32 -> vector<32x4xf32>
    %cst_76 = arith.constant 0.000000e+00 : f32
    %159 = vector.shape_cast %36 : vector<32x1xi1> to vector<32x1xi1>
    %160 = vector.broadcast %159 : vector<32x1xi1> to vector<32x4xi1>
    %161 = vector.broadcast %cst_76 : f32 to vector<32x4xf32>
    %162 = arith.select %160, %161, %158 : vector<32x4xi1>, vector<32x4xf32>
    %163 = tpu.concatenate %157, %150, %162 in 1 : vector<32x4xf32>, vector<32x4xf32>, vector<32x4xf32> -> vector<32x12xf32>
    %cst_77 = arith.constant dense<0.000000e+00> : vector<32x64xf32>
    %164 = tpu.matmul %163, %152, %cst_77 {dimension_numbers = #tpu.dot_dimension_numbers<[1], [0], [0], [1], [0, 0, 1, 1], [], []>} : vector<32x12xf32>, vector<12x64xf32>, vector<32x64xf32> -> vector<32x64xf32>
    %c2_78 = arith.constant 2 : index
    %c0_79 = arith.constant 0 : index
    %c0_80 = arith.constant 0 : index
    %165 = vector.load %arg3[%c2_78, %c0_79, %c0_80] : memref<4x1x64xf32, #tpu.memory_space<vmem>>, vector<1x1x64xf32>
    %166 = vector.shape_cast %165 : vector<1x1x64xf32> to vector<1x64xf32>
    %c2_81 = arith.constant 2 : index
    %c0_82 = arith.constant 0 : index
    %c0_83 = arith.constant 0 : index
    %167 = vector.load %arg4[%c2_81, %c0_82, %c0_83] : memref<4x1x64xf32, #tpu.memory_space<vmem>>, vector<1x1x64xf32>
    %168 = vector.shape_cast %167 : vector<1x1x64xf32> to vector<1x64xf32>
    %cst_84 = arith.constant dense<0.000000e+00> : vector<1x64xf32>
    %169 = tpu.matmul %37, %164, %cst_84 {dimension_numbers = #tpu.dot_dimension_numbers<[1], [0], [0], [1], [0, 0, 1, 1], [], []>} : vector<1x32xf32>, vector<32x64xf32>, vector<1x64xf32> -> vector<1x64xf32>
    %cst_85 = arith.constant 3.125000e-02 : f32
    %170 = vector.broadcast %cst_85 : f32 to vector<1x64xf32>
    %171 = arith.mulf %169, %170 : vector<1x64xf32>
    %172 = vector.broadcast %171 : vector<1x64xf32> to vector<32x64xf32>
    %173 = arith.subf %164, %172 : vector<32x64xf32>
    %174 = arith.mulf %173, %173 : vector<32x64xf32>
    %cst_86 = arith.constant dense<0.000000e+00> : vector<1x64xf32>
    %175 = tpu.matmul %37, %174, %cst_86 {dimension_numbers = #tpu.dot_dimension_numbers<[1], [0], [0], [1], [0, 0, 1, 1], [], []>} : vector<1x32xf32>, vector<32x64xf32>, vector<1x64xf32> -> vector<1x64xf32>
    %cst_87 = arith.constant 3.125000e-02 : f32
    %176 = vector.broadcast %cst_87 : f32 to vector<1x64xf32>
    %177 = arith.mulf %175, %176 : vector<1x64xf32>
    %cst_88 = arith.constant 9.99999974E-6 : f32
    %178 = vector.broadcast %cst_88 : f32 to vector<1x64xf32>
    %179 = arith.addf %177, %178 : vector<1x64xf32>
    %180 = math.rsqrt %179 : vector<1x64xf32>
    %181 = arith.mulf %166, %180 : vector<1x64xf32>
    %182 = vector.broadcast %181 : vector<1x64xf32> to vector<32x64xf32>
    %183 = arith.mulf %173, %182 : vector<32x64xf32>
    %184 = vector.broadcast %168 : vector<1x64xf32> to vector<32x64xf32>
    %185 = arith.addf %183, %184 : vector<32x64xf32>
    %cst_89 = arith.constant 0.000000e+00 : f32
    %186 = vector.broadcast %cst_89 : f32 to vector<32x64xf32>
    %187 = arith.maximumf %185, %186 : vector<32x64xf32>
    %c2_90 = arith.constant 2 : index
    %c0_91 = arith.constant 0 : index
    %c0_92 = arith.constant 0 : index
    %188 = vector.load %arg5[%c2_90, %c0_91, %c0_92] : memref<4x192x4xf32, #tpu.memory_space<vmem>>, vector<1x192x4xf32>
    %189 = vector.shape_cast %188 : vector<1x192x4xf32> to vector<192x4xf32>
    %c1_i32_93 = arith.constant 1 : i32
    %190 = tpu.dynamic_rotate %187 by %c1_i32_93 dim 0 : vector<32x64xf32>, i32 -> vector<32x64xf32>
    %cst_94 = arith.constant 0.000000e+00 : f32
    %191 = vector.shape_cast %18 : vector<32x1xi1> to vector<32x1xi1>
    %192 = vector.broadcast %191 : vector<32x1xi1> to vector<32x64xi1>
    %193 = vector.broadcast %cst_94 : f32 to vector<32x64xf32>
    %194 = arith.select %192, %193, %190 : vector<32x64xi1>, vector<32x64xf32>
    %c31_i32_95 = arith.constant 31 : i32
    %195 = tpu.dynamic_rotate %187 by %c31_i32_95 dim 0 : vector<32x64xf32>, i32 -> vector<32x64xf32>
    %cst_96 = arith.constant 0.000000e+00 : f32
    %196 = vector.shape_cast %36 : vector<32x1xi1> to vector<32x1xi1>
    %197 = vector.broadcast %196 : vector<32x1xi1> to vector<32x64xi1>
    %198 = vector.broadcast %cst_96 : f32 to vector<32x64xf32>
    %199 = arith.select %197, %198, %195 : vector<32x64xi1>, vector<32x64xf32>
    %200 = tpu.concatenate %194, %187, %199 in 1 : vector<32x64xf32>, vector<32x64xf32>, vector<32x64xf32> -> vector<32x192xf32>
    %cst_97 = arith.constant dense<0.000000e+00> : vector<32x4xf32>
    %201 = tpu.matmul %200, %189, %cst_97 {dimension_numbers = #tpu.dot_dimension_numbers<[1], [0], [0], [1], [0, 0, 1, 1], [], []>} : vector<32x192xf32>, vector<192x4xf32>, vector<32x4xf32> -> vector<32x4xf32>
    %202 = arith.addf %150, %201 : vector<32x4xf32>
    %c2_98 = arith.constant 2 : index
    %c0_99 = arith.constant 0 : index
    %c0_100 = arith.constant 0 : index
    %203 = vector.load %arg6[%c2_98, %c0_99, %c0_100] : memref<4x1x4xf32, #tpu.memory_space<vmem>>, vector<1x1x4xf32>
    %204 = vector.shape_cast %203 : vector<1x1x4xf32> to vector<1x4xf32>
    %205 = vector.broadcast %204 : vector<1x4xf32> to vector<32x4xf32>
    %206 = arith.addf %202, %205 : vector<32x4xf32>
    %c3 = arith.constant 3 : index
    %c0_101 = arith.constant 0 : index
    %c0_102 = arith.constant 0 : index
    %207 = vector.load %arg2[%c3, %c0_101, %c0_102] : memref<4x12x64xf32, #tpu.memory_space<vmem>>, vector<1x12x64xf32>
    %208 = vector.shape_cast %207 : vector<1x12x64xf32> to vector<12x64xf32>
    %c1_i32_103 = arith.constant 1 : i32
    %209 = tpu.dynamic_rotate %206 by %c1_i32_103 dim 0 : vector<32x4xf32>, i32 -> vector<32x4xf32>
    %cst_104 = arith.constant 0.000000e+00 : f32
    %210 = vector.shape_cast %18 : vector<32x1xi1> to vector<32x1xi1>
    %211 = vector.broadcast %210 : vector<32x1xi1> to vector<32x4xi1>
    %212 = vector.broadcast %cst_104 : f32 to vector<32x4xf32>
    %213 = arith.select %211, %212, %209 : vector<32x4xi1>, vector<32x4xf32>
    %c31_i32_105 = arith.constant 31 : i32
    %214 = tpu.dynamic_rotate %206 by %c31_i32_105 dim 0 : vector<32x4xf32>, i32 -> vector<32x4xf32>
    %cst_106 = arith.constant 0.000000e+00 : f32
    %215 = vector.shape_cast %36 : vector<32x1xi1> to vector<32x1xi1>
    %216 = vector.broadcast %215 : vector<32x1xi1> to vector<32x4xi1>
    %217 = vector.broadcast %cst_106 : f32 to vector<32x4xf32>
    %218 = arith.select %216, %217, %214 : vector<32x4xi1>, vector<32x4xf32>
    %219 = tpu.concatenate %213, %206, %218 in 1 : vector<32x4xf32>, vector<32x4xf32>, vector<32x4xf32> -> vector<32x12xf32>
    %cst_107 = arith.constant dense<0.000000e+00> : vector<32x64xf32>
    %220 = tpu.matmul %219, %208, %cst_107 {dimension_numbers = #tpu.dot_dimension_numbers<[1], [0], [0], [1], [0, 0, 1, 1], [], []>} : vector<32x12xf32>, vector<12x64xf32>, vector<32x64xf32> -> vector<32x64xf32>
    %c3_108 = arith.constant 3 : index
    %c0_109 = arith.constant 0 : index
    %c0_110 = arith.constant 0 : index
    %221 = vector.load %arg3[%c3_108, %c0_109, %c0_110] : memref<4x1x64xf32, #tpu.memory_space<vmem>>, vector<1x1x64xf32>
    %222 = vector.shape_cast %221 : vector<1x1x64xf32> to vector<1x64xf32>
    %c3_111 = arith.constant 3 : index
    %c0_112 = arith.constant 0 : index
    %c0_113 = arith.constant 0 : index
    %223 = vector.load %arg4[%c3_111, %c0_112, %c0_113] : memref<4x1x64xf32, #tpu.memory_space<vmem>>, vector<1x1x64xf32>
    %224 = vector.shape_cast %223 : vector<1x1x64xf32> to vector<1x64xf32>
    %cst_114 = arith.constant dense<0.000000e+00> : vector<1x64xf32>
    %225 = tpu.matmul %37, %220, %cst_114 {dimension_numbers = #tpu.dot_dimension_numbers<[1], [0], [0], [1], [0, 0, 1, 1], [], []>} : vector<1x32xf32>, vector<32x64xf32>, vector<1x64xf32> -> vector<1x64xf32>
    %cst_115 = arith.constant 3.125000e-02 : f32
    %226 = vector.broadcast %cst_115 : f32 to vector<1x64xf32>
    %227 = arith.mulf %225, %226 : vector<1x64xf32>
    %228 = vector.broadcast %227 : vector<1x64xf32> to vector<32x64xf32>
    %229 = arith.subf %220, %228 : vector<32x64xf32>
    %230 = arith.mulf %229, %229 : vector<32x64xf32>
    %cst_116 = arith.constant dense<0.000000e+00> : vector<1x64xf32>
    %231 = tpu.matmul %37, %230, %cst_116 {dimension_numbers = #tpu.dot_dimension_numbers<[1], [0], [0], [1], [0, 0, 1, 1], [], []>} : vector<1x32xf32>, vector<32x64xf32>, vector<1x64xf32> -> vector<1x64xf32>
    %cst_117 = arith.constant 3.125000e-02 : f32
    %232 = vector.broadcast %cst_117 : f32 to vector<1x64xf32>
    %233 = arith.mulf %231, %232 : vector<1x64xf32>
    %cst_118 = arith.constant 9.99999974E-6 : f32
    %234 = vector.broadcast %cst_118 : f32 to vector<1x64xf32>
    %235 = arith.addf %233, %234 : vector<1x64xf32>
    %236 = math.rsqrt %235 : vector<1x64xf32>
    %237 = arith.mulf %222, %236 : vector<1x64xf32>
    %238 = vector.broadcast %237 : vector<1x64xf32> to vector<32x64xf32>
    %239 = arith.mulf %229, %238 : vector<32x64xf32>
    %240 = vector.broadcast %224 : vector<1x64xf32> to vector<32x64xf32>
    %241 = arith.addf %239, %240 : vector<32x64xf32>
    %cst_119 = arith.constant 0.000000e+00 : f32
    %242 = vector.broadcast %cst_119 : f32 to vector<32x64xf32>
    %243 = arith.maximumf %241, %242 : vector<32x64xf32>
    %c3_120 = arith.constant 3 : index
    %c0_121 = arith.constant 0 : index
    %c0_122 = arith.constant 0 : index
    %244 = vector.load %arg5[%c3_120, %c0_121, %c0_122] : memref<4x192x4xf32, #tpu.memory_space<vmem>>, vector<1x192x4xf32>
    %245 = vector.shape_cast %244 : vector<1x192x4xf32> to vector<192x4xf32>
    %c1_i32_123 = arith.constant 1 : i32
    %246 = tpu.dynamic_rotate %243 by %c1_i32_123 dim 0 : vector<32x64xf32>, i32 -> vector<32x64xf32>
    %cst_124 = arith.constant 0.000000e+00 : f32
    %247 = vector.shape_cast %18 : vector<32x1xi1> to vector<32x1xi1>
    %248 = vector.broadcast %247 : vector<32x1xi1> to vector<32x64xi1>
    %249 = vector.broadcast %cst_124 : f32 to vector<32x64xf32>
    %250 = arith.select %248, %249, %246 : vector<32x64xi1>, vector<32x64xf32>
    %c31_i32_125 = arith.constant 31 : i32
    %251 = tpu.dynamic_rotate %243 by %c31_i32_125 dim 0 : vector<32x64xf32>, i32 -> vector<32x64xf32>
    %cst_126 = arith.constant 0.000000e+00 : f32
    %252 = vector.shape_cast %36 : vector<32x1xi1> to vector<32x1xi1>
    %253 = vector.broadcast %252 : vector<32x1xi1> to vector<32x64xi1>
    %254 = vector.broadcast %cst_126 : f32 to vector<32x64xf32>
    %255 = arith.select %253, %254, %251 : vector<32x64xi1>, vector<32x64xf32>
    %256 = tpu.concatenate %250, %243, %255 in 1 : vector<32x64xf32>, vector<32x64xf32>, vector<32x64xf32> -> vector<32x192xf32>
    %cst_127 = arith.constant dense<0.000000e+00> : vector<32x4xf32>
    %257 = tpu.matmul %256, %245, %cst_127 {dimension_numbers = #tpu.dot_dimension_numbers<[1], [0], [0], [1], [0, 0, 1, 1], [], []>} : vector<32x192xf32>, vector<192x4xf32>, vector<32x4xf32> -> vector<32x4xf32>
    %258 = arith.addf %206, %257 : vector<32x4xf32>
    %c3_128 = arith.constant 3 : index
    %c0_129 = arith.constant 0 : index
    %c0_130 = arith.constant 0 : index
    %259 = vector.load %arg6[%c3_128, %c0_129, %c0_130] : memref<4x1x4xf32, #tpu.memory_space<vmem>>, vector<1x1x4xf32>
    %260 = vector.shape_cast %259 : vector<1x1x4xf32> to vector<1x4xf32>
    %261 = vector.broadcast %260 : vector<1x4xf32> to vector<32x4xf32>
    %262 = arith.addf %258, %261 : vector<32x4xf32>
    %263 = vector.extract_strided_slice %262 {offsets = [0, 0], sizes = [16, 4], strides = [1, 1]} : vector<32x4xf32> to vector<16x4xf32>
    %c0_131 = arith.constant 0 : index
    %c0_132 = arith.constant 0 : index
    %264 = vector.load %arg7[%c0_131, %c0_132] : memref<16x16xf32, #tpu.memory_space<vmem>>, vector<16x16xf32>
    %cst_133 = arith.constant dense<0.000000e+00> : vector<16x4xf32>
    %265 = tpu.matmul %264, %263, %cst_133 {dimension_numbers = #tpu.dot_dimension_numbers<[1], [0], [0], [1], [0, 0, 1, 1], [], []>} : vector<16x16xf32>, vector<16x4xf32>, vector<16x4xf32> -> vector<16x4xf32>
    %c0_134 = arith.constant 0 : index
    %c0_135 = arith.constant 0 : index
    %266 = vector.load %arg8[%c0_134, %c0_135] : memref<16x1xf32, #tpu.memory_space<vmem>>, vector<16x1xf32>
    %267 = vector.broadcast %266 : vector<16x1xf32> to vector<16x4xf32>
    %268 = arith.addf %265, %267 : vector<16x4xf32>
    %269 = vector.extract_strided_slice %262 {offsets = [16, 0], sizes = [16, 4], strides = [1, 1]} : vector<32x4xf32> to vector<16x4xf32>
    %c0_136 = arith.constant 0 : index
    %c0_137 = arith.constant 0 : index
    %270 = vector.load %arg7[%c0_136, %c0_137] : memref<16x16xf32, #tpu.memory_space<vmem>>, vector<16x16xf32>
    %cst_138 = arith.constant dense<0.000000e+00> : vector<16x4xf32>
    %271 = tpu.matmul %270, %269, %cst_138 {dimension_numbers = #tpu.dot_dimension_numbers<[1], [0], [0], [1], [0, 0, 1, 1], [], []>} : vector<16x16xf32>, vector<16x4xf32>, vector<16x4xf32> -> vector<16x4xf32>
    %c0_139 = arith.constant 0 : index
    %c0_140 = arith.constant 0 : index
    %272 = vector.load %arg8[%c0_139, %c0_140] : memref<16x1xf32, #tpu.memory_space<vmem>>, vector<16x1xf32>
    %273 = vector.broadcast %272 : vector<16x1xf32> to vector<16x4xf32>
    %274 = arith.addf %271, %273 : vector<16x4xf32>
    %275 = tpu.concatenate %268, %274 in 0 : vector<16x4xf32>, vector<16x4xf32> -> vector<32x4xf32>
    %cst_141 = arith.constant 0.000000e+00 : f32
    %276 = vector.broadcast %cst_141 : f32 to vector<32x4xf32>
    %277 = arith.maximumf %275, %276 : vector<32x4xf32>
    %278 = arith.addf %262, %277 : vector<32x4xf32>
    %c0_142 = arith.constant 0 : index
    %c0_143 = arith.constant 0 : index
    %279 = vector.load %arg9[%c0_142, %c0_143] : memref<12x64xf32, #tpu.memory_space<vmem>>, vector<12x64xf32>
    %c1_i32_144 = arith.constant 1 : i32
    %280 = tpu.dynamic_rotate %278 by %c1_i32_144 dim 0 : vector<32x4xf32>, i32 -> vector<32x4xf32>
    %cst_145 = arith.constant 0.000000e+00 : f32
    %281 = vector.shape_cast %18 : vector<32x1xi1> to vector<32x1xi1>
    %282 = vector.broadcast %281 : vector<32x1xi1> to vector<32x4xi1>
    %283 = vector.broadcast %cst_145 : f32 to vector<32x4xf32>
    %284 = arith.select %282, %283, %280 : vector<32x4xi1>, vector<32x4xf32>
    %c31_i32_146 = arith.constant 31 : i32
    %285 = tpu.dynamic_rotate %278 by %c31_i32_146 dim 0 : vector<32x4xf32>, i32 -> vector<32x4xf32>
    %cst_147 = arith.constant 0.000000e+00 : f32
    %286 = vector.shape_cast %36 : vector<32x1xi1> to vector<32x1xi1>
    %287 = vector.broadcast %286 : vector<32x1xi1> to vector<32x4xi1>
    %288 = vector.broadcast %cst_147 : f32 to vector<32x4xf32>
    %289 = arith.select %287, %288, %285 : vector<32x4xi1>, vector<32x4xf32>
    %290 = tpu.concatenate %284, %278, %289 in 1 : vector<32x4xf32>, vector<32x4xf32>, vector<32x4xf32> -> vector<32x12xf32>
    %cst_148 = arith.constant dense<0.000000e+00> : vector<32x64xf32>
    %291 = tpu.matmul %290, %279, %cst_148 {dimension_numbers = #tpu.dot_dimension_numbers<[1], [0], [0], [1], [0, 0, 1, 1], [], []>} : vector<32x12xf32>, vector<12x64xf32>, vector<32x64xf32> -> vector<32x64xf32>
    %c0_149 = arith.constant 0 : index
    %c0_150 = arith.constant 0 : index
    %292 = vector.load %arg10[%c0_149, %c0_150] : memref<1x64xf32, #tpu.memory_space<vmem>>, vector<1x64xf32>
    %c0_151 = arith.constant 0 : index
    %c0_152 = arith.constant 0 : index
    %293 = vector.load %arg11[%c0_151, %c0_152] : memref<1x64xf32, #tpu.memory_space<vmem>>, vector<1x64xf32>
    %cst_153 = arith.constant dense<0.000000e+00> : vector<1x64xf32>
    %294 = tpu.matmul %37, %291, %cst_153 {dimension_numbers = #tpu.dot_dimension_numbers<[1], [0], [0], [1], [0, 0, 1, 1], [], []>} : vector<1x32xf32>, vector<32x64xf32>, vector<1x64xf32> -> vector<1x64xf32>
    %cst_154 = arith.constant 3.125000e-02 : f32
    %295 = vector.broadcast %cst_154 : f32 to vector<1x64xf32>
    %296 = arith.mulf %294, %295 : vector<1x64xf32>
    %297 = vector.broadcast %296 : vector<1x64xf32> to vector<32x64xf32>
    %298 = arith.subf %291, %297 : vector<32x64xf32>
    %299 = arith.mulf %298, %298 : vector<32x64xf32>
    %cst_155 = arith.constant dense<0.000000e+00> : vector<1x64xf32>
    %300 = tpu.matmul %37, %299, %cst_155 {dimension_numbers = #tpu.dot_dimension_numbers<[1], [0], [0], [1], [0, 0, 1, 1], [], []>} : vector<1x32xf32>, vector<32x64xf32>, vector<1x64xf32> -> vector<1x64xf32>
    %cst_156 = arith.constant 3.125000e-02 : f32
    %301 = vector.broadcast %cst_156 : f32 to vector<1x64xf32>
    %302 = arith.mulf %300, %301 : vector<1x64xf32>
    %cst_157 = arith.constant 9.99999974E-6 : f32
    %303 = vector.broadcast %cst_157 : f32 to vector<1x64xf32>
    %304 = arith.addf %302, %303 : vector<1x64xf32>
    %305 = math.rsqrt %304 : vector<1x64xf32>
    %306 = arith.mulf %292, %305 : vector<1x64xf32>
    %307 = vector.broadcast %306 : vector<1x64xf32> to vector<32x64xf32>
    %308 = arith.mulf %298, %307 : vector<32x64xf32>
    %309 = vector.broadcast %293 : vector<1x64xf32> to vector<32x64xf32>
    %310 = arith.addf %308, %309 : vector<32x64xf32>
    %cst_158 = arith.constant 0.000000e+00 : f32
    %311 = vector.broadcast %cst_158 : f32 to vector<32x64xf32>
    %312 = arith.maximumf %310, %311 : vector<32x64xf32>
    %c0_159 = arith.constant 0 : index
    %c0_160 = arith.constant 0 : index
    %313 = vector.load %arg12[%c0_159, %c0_160] : memref<192x128xf32, #tpu.memory_space<vmem>>, vector<192x128xf32>
    %c1_i32_161 = arith.constant 1 : i32
    %314 = tpu.dynamic_rotate %312 by %c1_i32_161 dim 0 : vector<32x64xf32>, i32 -> vector<32x64xf32>
    %cst_162 = arith.constant 0.000000e+00 : f32
    %315 = vector.shape_cast %18 : vector<32x1xi1> to vector<32x1xi1>
    %316 = vector.broadcast %315 : vector<32x1xi1> to vector<32x64xi1>
    %317 = vector.broadcast %cst_162 : f32 to vector<32x64xf32>
    %318 = arith.select %316, %317, %314 : vector<32x64xi1>, vector<32x64xf32>
    %c31_i32_163 = arith.constant 31 : i32
    %319 = tpu.dynamic_rotate %312 by %c31_i32_163 dim 0 : vector<32x64xf32>, i32 -> vector<32x64xf32>
    %cst_164 = arith.constant 0.000000e+00 : f32
    %320 = vector.shape_cast %36 : vector<32x1xi1> to vector<32x1xi1>
    %321 = vector.broadcast %320 : vector<32x1xi1> to vector<32x64xi1>
    %322 = vector.broadcast %cst_164 : f32 to vector<32x64xf32>
    %323 = arith.select %321, %322, %319 : vector<32x64xi1>, vector<32x64xf32>
    %324 = tpu.concatenate %318, %312, %323 in 1 : vector<32x64xf32>, vector<32x64xf32>, vector<32x64xf32> -> vector<32x192xf32>
    %cst_165 = arith.constant dense<0.000000e+00> : vector<32x128xf32>
    %325 = tpu.matmul %324, %313, %cst_165 {dimension_numbers = #tpu.dot_dimension_numbers<[1], [0], [0], [1], [0, 0, 1, 1], [], []>} : vector<32x192xf32>, vector<192x128xf32>, vector<32x128xf32> -> vector<32x128xf32>
    %c0_166 = arith.constant 0 : index
    %c0_167 = arith.constant 0 : index
    %326 = vector.load %arg13[%c0_166, %c0_167] : memref<1x128xf32, #tpu.memory_space<vmem>>, vector<1x128xf32>
    %327 = vector.broadcast %326 : vector<1x128xf32> to vector<32x128xf32>
    %328 = arith.addf %325, %327 : vector<32x128xf32>
    %c0_168 = arith.constant 0 : index
    %c0_169 = arith.constant 0 : index
    %329 = vector.load %arg14[%c0_168, %c0_169] : memref<32x128xf32, #tpu.memory_space<vmem>>, vector<32x128xf32>
    tpu.vector_store %arg14[%c0_168, %c0_169], %328 {strides = array<i32>} : memref<32x128xf32, #tpu.memory_space<vmem>>, vector<32x128xf32>,
    return
  }
  func.func @transform_0(%arg0: i32) -> (i32, i32) {
    %c0_i32 = arith.constant 0 : i32
    %c0_i32_0 = arith.constant 0 : i32
    %c0_i32_1 = arith.constant 0 : i32
    return %c0_i32, %c0_i32_0 : i32, i32
  }
  func.func @transform_1(%arg0: i32) -> (i32, i32, i32) {
    %c0_i32 = arith.constant 0 : i32
    %c0_i32_0 = arith.constant 0 : i32
    %c0_i32_1 = arith.constant 0 : i32
    %c0_i32_2 = arith.constant 0 : i32
    return %c0_i32, %c0_i32_0, %c0_i32_1 : i32, i32, i32
  }
  func.func @transform_2(%arg0: i32) -> (i32, i32, i32) {
    %c0_i32 = arith.constant 0 : i32
    %c0_i32_0 = arith.constant 0 : i32
    %c0_i32_1 = arith.constant 0 : i32
    %c0_i32_2 = arith.constant 0 : i32
    return %c0_i32, %c0_i32_0, %c0_i32_1 : i32, i32, i32
  }
  func.func @transform_3(%arg0: i32) -> (i32, i32, i32) {
    %c0_i32 = arith.constant 0 : i32
    %c0_i32_0 = arith.constant 0 : i32
    %c0_i32_1 = arith.constant 0 : i32
    %c0_i32_2 = arith.constant 0 : i32
    return %c0_i32, %c0_i32_0, %c0_i32_1 : i32, i32, i32
  }
  func.func @transform_4(%arg0: i32) -> (i32, i32, i32) {
    %c0_i32 = arith.constant 0 : i32
    %c0_i32_0 = arith.constant 0 : i32
    %c0_i32_1 = arith.constant 0 : i32
    %c0_i32_2 = arith.constant 0 : i32
    return %c0_i32, %c0_i32_0, %c0_i32_1 : i32, i32, i32
  }
  func.func @transform_5(%arg0: i32) -> (i32, i32, i32) {
    %c0_i32 = arith.constant 0 : i32
    %c0_i32_0 = arith.constant 0 : i32
    %c0_i32_1 = arith.constant 0 : i32
    %c0_i32_2 = arith.constant 0 : i32
    return %c0_i32, %c0_i32_0, %c0_i32_1 : i32, i32, i32
  }
  func.func @transform_6(%arg0: i32) -> (i32, i32) {
    %c0_i32 = arith.constant 0 : i32
    %c0_i32_0 = arith.constant 0 : i32
    %c0_i32_1 = arith.constant 0 : i32
    return %c0_i32, %c0_i32_0 : i32, i32
  }
  func.func @transform_7(%arg0: i32) -> (i32, i32) {
    %c0_i32 = arith.constant 0 : i32
    %c0_i32_0 = arith.constant 0 : i32
    %c0_i32_1 = arith.constant 0 : i32
    return %c0_i32, %c0_i32_0 : i32, i32
  }
  func.func @transform_8(%arg0: i32) -> (i32, i32) {
    %c0_i32 = arith.constant 0 : i32
    %c0_i32_0 = arith.constant 0 : i32
    %c0_i32_1 = arith.constant 0 : i32
    return %c0_i32, %c0_i32_0 : i32, i32
  }
  func.func @transform_9(%arg0: i32) -> (i32, i32) {
    %c0_i32 = arith.constant 0 : i32
    %c0_i32_0 = arith.constant 0 : i32
    %c0_i32_1 = arith.constant 0 : i32
    return %c0_i32, %c0_i32_0 : i32, i32
  }
  func.func @transform_10(%arg0: i32) -> (i32, i32) {
    %c0_i32 = arith.constant 0 : i32
    %c0_i32_0 = arith.constant 0 : i32
    %c0_i32_1 = arith.constant 0 : i32
    return %c0_i32, %c0_i32_0 : i32, i32
  }
  func.func @transform_11(%arg0: i32) -> (i32, i32) {
    %c0_i32 = arith.constant 0 : i32
    %c0_i32_0 = arith.constant 0 : i32
    %c0_i32_1 = arith.constant 0 : i32
    return %c0_i32, %c0_i32_0 : i32, i32
  }
  func.func @transform_12(%arg0: i32) -> (i32, i32) {
    %c0_i32 = arith.constant 0 : i32
    %c0_i32_0 = arith.constant 0 : i32
    %c0_i32_1 = arith.constant 0 : i32
    return %c0_i32, %c0_i32_0 : i32, i32
  }
  func.func @transform_13(%arg0: i32) -> (i32, i32) {
    %c0_i32 = arith.constant 0 : i32
    %c0_i32_0 = arith.constant 0 : i32
    %c0_i32_1 = arith.constant 0 : i32
    return %c0_i32, %c0_i32_0 : i32, i32
  }
}

</mosaic_0001>

<llo_original>
// kernel: static_embedding_forward.1
$region0: #{static_embedding_forward.1}
  #allocation0 [shape = 'u32[]', space=smem, size = 0x4, offset = 0x4, fixed_abs, tag = 'smem constant byte address 0x4 - core index']
  #allocation1 [shape = 'u32[72,128]{1,0:T(1,128)}', space=vmem, size = 0x9000, scoped, tag = 'internal scratch']
  %s0 = inlined_call_operand.vmem [shape: f32[32,4], index: 0, kind: input, shape index: {}]
  %s1 = inlined_call_operand.vmem [shape: f32[4,12,64], index: 1, kind: input, shape index: {}]
  %s2 = inlined_call_operand.vmem [shape: f32[4,1,64], index: 2, kind: input, shape index: {}]
  %s3 = inlined_call_operand.vmem [shape: f32[4,1,64], index: 3, kind: input, shape index: {}]
  %s4 = inlined_call_operand.vmem [shape: f32[4,192,4], index: 4, kind: input, shape index: {}]
  %s5 = inlined_call_operand.vmem [shape: f32[4,1,4], index: 5, kind: input, shape index: {}]
  %s6 = inlined_call_operand.vmem [shape: f32[16,16], index: 6, kind: input, shape index: {}]
  %s7 = inlined_call_operand.vmem [shape: f32[16,1], index: 7, kind: input, shape index: {}]
  %s8 = inlined_call_operand.vmem [shape: f32[12,64], index: 8, kind: input, shape index: {}]
  %s9 = inlined_call_operand.vmem [shape: f32[1,64], index: 9, kind: input, shape index: {}]
  %s10 = inlined_call_operand.vmem [shape: f32[1,64], index: 10, kind: input, shape index: {}]
  %s11 = inlined_call_operand.vmem [shape: f32[192,128], index: 11, kind: input, shape index: {}]
  %s12 = inlined_call_operand.vmem [shape: f32[1,128], index: 12, kind: input, shape index: {}]
  %s13 = inlined_call_operand.hbm [shape: f32[32,128], index: 13, kind: output, shape index: {}]
  %s14 = sld [smem:[#allocation0]]
  $region62: #{static_embedding_forward.1} parent=0
    _
  %s16 = ssub.s32 1, %s14
  %s17 = scalar_select 0, %s16, %s14
  $region1: #{static_embedding_forward.1} parent=0
    #allocation2 [shape = 'u8[16384]{0}', space=vmem, size = 0x4000, scoped, tag = 'output window, operand 0, single buffered']
    #allocation3 [shape = 's32[1]{0}', space=sflag, size = 0x4, scoped, tag = 'scoped memory for static_embedding_forward.1']
    %18 = vsyncpa [#allocation3], 0
    // Predicated region
    $region2: #{static_embedding_forward.1} parent=1 // pred_check
      _
    $region3: #{static_embedding_forward.1} parent=1 // pred_check_branch
      %20 = sbr.rel (0) target = $region5
    $region4: #{static_embedding_forward.1} parent=1 // pred_region
      _
    $region5: #{static_embedding_forward.1} parent=1 // pred_fallthru
      _
    // Predicated region
    $region6: #{static_embedding_forward.1} parent=1 // pred_check
      _
    $region7: #{static_embedding_forward.1} parent=1 // pred_check_branch
      %22 = sbr.rel (0) target = $region9
    $region8: #{static_embedding_forward.1} parent=1 // pred_region
      _
    $region9: #{static_embedding_forward.1} parent=1 // pred_fallthru
      _
    // Predicated region
    $region10: #{static_embedding_forward.1} parent=1 // pred_check
      _
    $region11: #{static_embedding_forward.1} parent=1 // pred_check_branch
      %24 = sbr.rel (0) target = $region13
    $region12: #{static_embedding_forward.1} parent=1 // pred_region
      _
    $region13: #{static_embedding_forward.1} parent=1 // pred_fallthru
      _
    // Predicated region
    $region14: #{static_embedding_forward.1} parent=1 // pred_check
      _
    $region15: #{static_embedding_forward.1} parent=1 // pred_check_branch
      %26 = sbr.rel (0) target = $region17
    $region16: #{static_embedding_forward.1} parent=1 // pred_region
      _
    $region17: #{static_embedding_forward.1} parent=1 // pred_fallthru
      _
    // Predicated region
    $region18: #{static_embedding_forward.1} parent=1 // pred_check
      _
    $region19: #{static_embedding_forward.1} parent=1 // pred_check_branch
      %28 = sbr.rel (0) target = $region21
    $region20: #{static_embedding_forward.1} parent=1 // pred_region
      _
    $region21: #{static_embedding_forward.1} parent=1 // pred_fallthru
      _
    // Predicated region
    $region22: #{static_embedding_forward.1} parent=1 // pred_check
      _
    $region23: #{static_embedding_forward.1} parent=1 // pred_check_branch
      %30 = sbr.rel (0) target = $region25
    $region24: #{static_embedding_forward.1} parent=1 // pred_region
      _
    $region25: #{static_embedding_forward.1} parent=1 // pred_fallthru
      _
    // Predicated region
    $region26: #{static_embedding_forward.1} parent=1 // pred_check
      _
    $region27: #{static_embedding_forward.1} parent=1 // pred_check_branch
      %32 = sbr.rel (0) target = $region29
    $region28: #{static_embedding_forward.1} parent=1 // pred_region
      _
    $region29: #{static_embedding_forward.1} parent=1 // pred_fallthru
      _
    // Predicated region
    $region30: #{static_embedding_forward.1} parent=1 // pred_check
      _
    $region31: #{static_embedding_forward.1} parent=1 // pred_check_branch
      %34 = sbr.rel (0) target = $region33
    $region32: #{static_embedding_forward.1} parent=1 // pred_region
      _
    $region33: #{static_embedding_forward.1} parent=1 // pred_fallthru
      _
    // Predicated region
    $region34: #{static_embedding_forward.1} parent=1 // pred_check
      _
    $region35: #{static_embedding_forward.1} parent=1 // pred_check_branch
      %36 = sbr.rel (0) target = $region37
    $region36: #{static_embedding_forward.1} parent=1 // pred_region
      _
    $region37: #{static_embedding_forward.1} parent=1 // pred_fallthru
      _
    // Predicated region
    $region38: #{static_embedding_forward.1} parent=1 // pred_check
      _
    $region39: #{static_embedding_forward.1} parent=1 // pred_check_branch
      %38 = sbr.rel (0) target = $region41
    $region40: #{static_embedding_forward.1} parent=1 // pred_region
      _
    $region41: #{static_embedding_forward.1} parent=1 // pred_fallthru
      _
    // Predicated region
    $region42: #{static_embedding_forward.1} parent=1 // pred_check
      _
    $region43: #{static_embedding_forward.1} parent=1 // pred_check_branch
      %40 = sbr.rel (0) target = $region45
    $region44: #{static_embedding_forward.1} parent=1 // pred_region
      _
    $region45: #{static_embedding_forward.1} parent=1 // pred_fallthru
      _
    // Predicated region
    $region46: #{static_embedding_forward.1} parent=1 // pred_check
      _
    $region47: #{static_embedding_forward.1} parent=1 // pred_check_branch
      %42 = sbr.rel (0) target = $region49
    $region48: #{static_embedding_forward.1} parent=1 // pred_region
      _
    $region49: #{static_embedding_forward.1} parent=1 // pred_fallthru
      _
    // Predicated region
    $region50: #{static_embedding_forward.1} parent=1 // pred_check
      _
    $region51: #{static_embedding_forward.1} parent=1 // pred_check_branch
      %44 = sbr.rel (0) target = $region53
    $region52: #{static_embedding_forward.1} parent=1 // pred_region
      _
    $region53: #{static_embedding_forward.1} parent=1 // pred_fallthru
      _
    %v45 = vlaneseq
    %v46 = vshrl.u32 %v45, 7
    %v47 = vadd.s32 %v46, 8
    %v48 = vadd.s32 %v46, 16
    %v49 = vadd.s32 %v46, 24
    %vm50 = vcmp.lt.s32.totalorder %v46, 0
    %v51 = vsub.s32 0, %v46
    %v52 = vsel %vm50, %v51, %v46
    %v53 = vshrl.u32 %v52, 4
    %v54 = vand.u32 %v52, 15
    %v55 = vsub.s32 0, %v54
    %v56 = vsel %vm50, %v55, %v54
    %vm57 = vcmp.lt.s32.totalorder %v47, 0
    %v58 = vsub.s32 0, %v47
    %v59 = vsel %vm57, %v58, %v47
    %v60 = vshrl.u32 %v59, 4
    %v61 = vand.u32 %v59, 15
    %v62 = vsub.s32 0, %v61
    %v63 = vsel %vm57, %v62, %v61
    %vm64 = vcmp.lt.s32.totalorder %v48, 0
    %v65 = vsub.s32 0, %v48
    %v66 = vsel %vm64, %v65, %v48
    %v67 = vshrl.u32 %v66, 4
    %v68 = vand.u32 %v66, 15
    %v69 = vsub.s32 0, %v68
    %v70 = vsel %vm64, %v69, %v68
    %vm71 = vcmp.lt.s32.totalorder %v49, 0
    %v72 = vsub.s32 0, %v49
    %v73 = vsel %vm71, %v72, %v49
    %v74 = vshrl.u32 %v73, 4
    %v75 = vand.u32 %v73, 15
    %v76 = vsub.s32 0, %v75
    %v77 = vsel %vm71, %v76, %v75
    %vm78 = vcmp.ne.s32.totalorder %v56, 0
    %vm79 = vcmp.ne.s32.totalorder %v63, 0
    %vm80 = vcmp.ne.s32.totalorder %v70, 0
    %vm81 = vcmp.ne.s32.totalorder %v77, 0
    %vm82 = vcmp.lt.s32.totalorder %v56, 0
    %vm83 = vcmp.lt.s32.totalorder %v63, 0
    %vm84 = vcmp.lt.s32.totalorder %v70, 0
    %vm85 = vcmp.lt.s32.totalorder %v77, 0
    %vm86 = vmand %vm82, %vm78
    %vm87 = vmand %vm83, %vm79
    %vm88 = vmand %vm84, %vm80
    %vm89 = vmand %vm85, %vm81
    %v90 = vadd.s32 %v56, 16
    %v91 = vadd.s32 %v63, 16
    %v92 = vadd.s32 %v70, 16
    %v93 = vadd.s32 %v77, 16
    %v94 = vsel %vm86, %v90, %v56
    %v95 = vsel %vm87, %v91, %v63
    %v96 = vsel %vm88, %v92, %v70
    %v97 = vsel %vm89, %v93, %v77
    %vm98 = vcmp.eq.s32.totalorder %v94, 0
    %vm99 = vcmp.eq.s32.totalorder %v95, 0
    %vm100 = vcmp.eq.s32.totalorder %v96, 0
    %vm101 = vcmp.eq.s32.totalorder %v97, 0
    %vm102 = vcmp.eq.s32.totalorder %v94, 15
    %vm103 = vcmp.eq.s32.totalorder %v95, 15
    %vm104 = vcmp.eq.s32.totalorder %v96, 15
    %vm105 = vcmp.eq.s32.totalorder %v97, 15
    %v106 = vld [vmem:[%s0] sm:$0xff]
    %v107 = vld [vmem:[%s0 + $0x8] sm:$0xff]
    %v108 = vld [vmem:[%s0 + $0x10] sm:$0xff]
    %v109 = vld [vmem:[%s0 + $0x18] sm:$0xff]
    %v110 = vld [vmem:[%s1] sm:$0xff]
    %v111 = vld [vmem:[%s1 + $0x8] sm:$0xf]
    %v112 = vrot.slane %v106, 7
    %v113 = vrot.slane %v107, 7
    %v114 = vrot.slane %v108, 7
    %v115 = vrot.slane %v109, 7
    %vm116 = vcmp.lt.s32.totalorder %v46, 1
    %v117 = vsel %vm116, %v114, %v115
    %v118 = vsel %vm116, %v113, %v114
    %v119 = vsel %vm116, %v112, %v113
    %v120 = vsel %vm116, %v115, %v112
    %v121 = vsel %vm98, 1, 0
    %v122 = vsel %vm99, 1, 0
    %v123 = vsel %vm100, 1, 0
    %v124 = vsel %vm101, 1, 0
    %vm125 = vcmp.eq.s32.totalorder %v121, 1
    %vm126 = vcmp.eq.s32.totalorder %v122, 1
    %vm127 = vcmp.eq.s32.totalorder %v123, 1
    %vm128 = vcmp.eq.s32.totalorder %v124, 1
    %v129 = vsel %vm125, 0.0, %v120
    %v130 = vsel %vm126, 0.0, %v119
    %v131 = vsel %vm127, 0.0, %v118
    %v132 = vsel %vm128, 0.0, %v117
    %v133 = vrot.slane %v106, 1
    %v134 = vrot.slane %v107, 1
    %v135 = vrot.slane %v108, 1
    %v136 = vrot.slane %v109, 1
    %vm137 = vcmp.lt.s32.totalorder %v46, 7
    %v138 = vsel %vm137, %v135, %v136
    %v139 = vsel %vm137, %v134, %v135
    %v140 = vsel %vm137, %v133, %v134
    %v141 = vsel %vm137, %v136, %v133
    %v142 = vsel %vm102, 1, 0
    %v143 = vsel %vm103, 1, 0
    %v144 = vsel %vm104, 1, 0
    %v145 = vsel %vm105, 1, 0
    %vm146 = vcmp.eq.s32.totalorder %v142, 1
    %vm147 = vcmp.eq.s32.totalorder %v143, 1
    %vm148 = vcmp.eq.s32.totalorder %v144, 1
    %vm149 = vcmp.eq.s32.totalorder %v145, 1
    %v150 = vsel %vm146, 0.0, %v140
    %v151 = vsel %vm147, 0.0, %v139
    %v152 = vsel %vm148, 0.0, %v138
    %v153 = vsel %vm149, 0.0, %v141
    %158 = vrot.lane.b32.xlu0 %v106, 4
    %v159 = vpop.permute.xlu0 %158
    %160 = vrot.lane.b32.xlu0 %v107, 4
    %v161 = vpop.permute.xlu0 %160
    %162 = vrot.lane.b32.xlu0 %v108, 4
    %v163 = vpop.permute.xlu0 %162
    %164 = vrot.lane.b32.xlu0 %v109, 4
    %v165 = vpop.permute.xlu0 %164
    %174 = vrot.lane.b32.xlu0 %v150, 8
    %v175 = vpop.permute.xlu0 %174
    %176 = vrot.lane.b32.xlu0 %v151, 8
    %v177 = vpop.permute.xlu0 %176
    %178 = vrot.lane.b32.xlu0 %v152, 8
    %v179 = vpop.permute.xlu0 %178
    %180 = vrot.lane.b32.xlu0 %v153, 8
    %v181 = vpop.permute.xlu0 %180
    %vm186 = vcmask 31744
    %v187 = vsel %vm186, %v129, %v159
    %v188 = vsel %vm186, %v130, %v161
    %v189 = vsel %vm186, %v131, %v163
    %v190 = vsel %vm186, %v132, %v165
    %vm191 = vcmask 64512
    %v192 = vsel %vm191, %v187, %v175
    %v193 = vsel %vm191, %v188, %v177
    %v194 = vsel %vm191, %v189, %v179
    %v195 = vsel %vm191, %v190, %v181
    %vm196 = vcmask 97280
    %v198 = vsel %vm196, %v192, 0
    %v201 = vsel %vm196, %v193, 0
    %v204 = vsel %vm196, %v194, 0
    %v207 = vsel %vm196, %v195, 0
    %vm209 = vcmask 1043456
    %v211 = vsel %vm209, %v111, 0
    %213 = vmatpush.msra.mxu0 0.0
    %214 = vmatpush.msra.mxu0 0.0
    %215 = vmatpush.msra.mxu0 0.0
    %216 = vmatpush.msra.mxu0 0.0
    %217 = vmatpush.msra.mxu0 0.0
    %218 = vmatpush.msra.mxu0 0.0
    %219 = vmatpush.msra.mxu0 0.0
    %220 = vmatpush.msra.mxu0 0.0
    %221 = vmatpush.msra.mxu0 0.0
    %222 = vmatpush.msra.mxu0 0.0
    %223 = vmatpush.msra.mxu0 0.0
    %224 = vmatpush.msra.mxu0 0.0
    %225 = vmatpush.msra.mxu0 0.0
    %226 = vmatpush.msra.mxu0 0.0
    %227 = vmatpush.msra.mxu0 %v211
    %228 = vmatpush.msra.mxu0 %v110
    %229 = vmatmul.f32.gmra.mxu0 %v198
    %v230 = vpop.f32.mrf.mxu0
    %v231 = vadd.f32 0.0, %v230
    %232 = vmatmul.f32.gmra.mxu0 %v201
    %v233 = vpop.f32.mrf.mxu0
    %v234 = vadd.f32 0.0, %v233
    %235 = vmatmul.f32.gmra.mxu0 %v204
    %v236 = vpop.f32.mrf.mxu0
    %v237 = vadd.f32 0.0, %v236
    %238 = vmatmul.f32.gmra.mxu0 %v207
    %v239 = vpop.f32.mrf.mxu0
    %v240 = vadd.f32 0.0, %v239
    %241 = vdwg.mxu0
    %v242 = vld [vmem:[%s2] sm:$0x1]
    %v243 = vld [vmem:[%s3] sm:$0x1]
    %vm244 = vcmask 261120
    %v246 = vsel %vm244, 1.0, 0
    %248 = vmatpush.msra.mxu0 0.0
    %249 = vmatpush.msra.mxu0 0.0
    %250 = vmatpush.msra.mxu0 0.0
    %251 = vmatpush.msra.mxu0 0.0
    %252 = vmatpush.msra.mxu0 0.0
    %253 = vmatpush.msra.mxu0 0.0
    %254 = vmatpush.msra.mxu0 0.0
    %255 = vmatpush.msra.mxu0 0.0
    %256 = vmatpush.msra.mxu0 0.0
    %257 = vmatpush.msra.mxu0 0.0
    %258 = vmatpush.msra.mxu0 0.0
    %259 = vmatpush.msra.mxu0 0.0
    %260 = vmatpush.msra.mxu0 %v240
    %261 = vmatpush.msra.mxu0 %v237
    %262 = vmatpush.msra.mxu0 %v234
    %263 = vmatpush.msra.mxu0 %v231
    %264 = vmatmul.f32.gmra.mxu0 %v246
    %v265 = vpop.f32.mrf.mxu0
    %v266 = vadd.f32 0.0, %v265
    %267 = vdwg.mxu0
    %v268 = vmul.f32 %v266, 0.03125
    %v269 = vperm.slane %v268, 0
    %v270 = vsub.f32 %v231, %v269
    %v271 = vsub.f32 %v234, %v269
    %v272 = vsub.f32 %v237, %v269
    %v273 = vsub.f32 %v240, %v269
    %v274 = vmul.f32 %v270, %v270
    %v275 = vmul.f32 %v271, %v271
    %v276 = vmul.f32 %v272, %v272
    %v277 = vmul.f32 %v273, %v273
    %278 = vmatpush.msra.mxu0 0.0
    %279 = vmatpush.msra.mxu0 0.0
    %280 = vmatpush.msra.mxu0 0.0
    %281 = vmatpush.msra.mxu0 0.0
    %282 = vmatpush.msra.mxu0 0.0
    %283 = vmatpush.msra.mxu0 0.0
    %284 = vmatpush.msra.mxu0 0.0
    %285 = vmatpush.msra.mxu0 0.0
    %286 = vmatpush.msra.mxu0 0.0
    %287 = vmatpush.msra.mxu0 0.0
    %288 = vmatpush.msra.mxu0 0.0
    %289 = vmatpush.msra.mxu0 0.0
    %290 = vmatpush.msra.mxu0 %v277
    %291 = vmatpush.msra.mxu0 %v276
    %292 = vmatpush.msra.mxu0 %v275
    %293 = vmatpush.msra.mxu0 %v274
    %294 = vmatmul.f32.gmra.mxu0 %v246
    %v295 = vpop.f32.mrf.mxu0
    %v296 = vadd.f32 0.0, %v295
    %297 = vdwg.mxu0
    %v298 = vmul.f32 %v296, 0.03125
    %v299 = vadd.f32 %v298, 1e-05
    %v300 = vrsqrt.pop %v299
    %v301 = vmul.f32 %v300, %v299
    %v302 = vmul.f32 %v301, %v300
    %v303 = vmul.f32 0.5, %v302
    %v304 = vsub.f32 1.5, %v303
    %v305 = vmul.f32 %v300, %v304
    %vm306 = vweird.f32 %v299
    %vm307 = vweird.f32 %v300
    %vm308 = vmor %vm306, %vm307
    %v309 = vsel %vm308, %v300, %v305
    %v310 = vmul.f32 %v242, %v309
    %v312 = vperm.slane %v310, 0
    %v314 = vmul.f32 %v270, %v312
    %v315 = vmul.f32 %v271, %v312
    %v316 = vmul.f32 %v272, %v312
    %v317 = vmul.f32 %v273, %v312
    %v319 = vperm.slane %v243, 0
    %v321 = vadd.f32 %v314, %v319
    %v322 = vadd.f32 %v315, %v319
    %v323 = vadd.f32 %v316, %v319
    %v324 = vadd.f32 %v317, %v319
    %v325 = vmax.f32 %v321, 0.0
    %v326 = vmax.f32 %v322, 0.0
    %v327 = vmax.f32 %v323, 0.0
    %v328 = vmax.f32 %v324, 0.0
    %v329 = vld [vmem:[%s4] sm:$0xff]
    %v330 = vld [vmem:[%s4 + $0x8] sm:$0xff]
    %v331 = vld [vmem:[%s4 + $0x10] sm:$0xff]
    %v332 = vld [vmem:[%s4 + $0x18] sm:$0xff]
    %v333 = vld [vmem:[%s4 + $0x20] sm:$0xff]
    %v334 = vld [vmem:[%s4 + $0x28] sm:$0xff]
    %v335 = vld [vmem:[%s4 + $0x30] sm:$0xff]
    %v336 = vld [vmem:[%s4 + $0x38] sm:$0xff]
    %v337 = vld [vmem:[%s4 + $0x40] sm:$0xff]
    %v338 = vld [vmem:[%s4 + $0x48] sm:$0xff]
    %v339 = vld [vmem:[%s4 + $0x50] sm:$0xff]
    %v340 = vld [vmem:[%s4 + $0x58] sm:$0xff]
    %v341 = vld [vmem:[%s4 + $0x60] sm:$0xff]
    %v342 = vld [vmem:[%s4 + $0x68] sm:$0xff]
    %v343 = vld [vmem:[%s4 + $0x70] sm:$0xff]
    %v344 = vld [vmem:[%s4 + $0x78] sm:$0xff]
    %v345 = vld [vmem:[%s4 + $0x80] sm:$0xff]
    %v346 = vld [vmem:[%s4 + $0x88] sm:$0xff]
    %v347 = vld [vmem:[%s4 + $0x90] sm:$0xff]
    %v348 = vld [vmem:[%s4 + $0x98] sm:$0xff]
    %v349 = vld [vmem:[%s4 + $0xa0] sm:$0xff]
    %v350 = vld [vmem:[%s4 + $0xa8] sm:$0xff]
    %v351 = vld [vmem:[%s4 + $0xb0] sm:$0xff]
    %v352 = vld [vmem:[%s4 + $0xb8] sm:$0xff]
    %v353 = vrot.slane %v325, 7
    %v354 = vrot.slane %v326, 7
    %v355 = vrot.slane %v327, 7
    %v356 = vrot.slane %v328, 7
    %v357 = vsel %vm116, %v355, %v356
    %v358 = vsel %vm116, %v354, %v355
    %v359 = vsel %vm116, %v353, %v354
    %v360 = vsel %vm116, %v356, %v353
    %v361 = vsel %vm125, 0.0, %v360
    %v362 = vsel %vm126, 0.0, %v359
    %v363 = vsel %vm127, 0.0, %v358
    %v364 = vsel %vm128, 0.0, %v357
    %v365 = vrot.slane %v325, 1
    %v366 = vrot.slane %v326, 1
    %v367 = vrot.slane %v327, 1
    %v368 = vrot.slane %v328, 1
    %v369 = vsel %vm137, %v367, %v368
    %v370 = vsel %vm137, %v366, %v367
    %v371 = vsel %vm137, %v365, %v366
    %v372 = vsel %vm137, %v368, %v365
    %v373 = vsel %vm146, 0.0, %v371
    %v374 = vsel %vm147, 0.0, %v370
    %v375 = vsel %vm148, 0.0, %v369
    %v376 = vsel %vm149, 0.0, %v372
    %381 = vrot.lane.b32.xlu0 %v325, 64
    %v382 = vpop.permute.xlu0 %381
    %383 = vrot.lane.b32.xlu0 %v326, 64
    %v384 = vpop.permute.xlu0 %383
    %385 = vrot.lane.b32.xlu0 %v327, 64
    %v386 = vpop.permute.xlu0 %385
    %387 = vrot.lane.b32.xlu0 %v328, 64
    %v388 = vpop.permute.xlu0 %387
    %vm393 = vcmask 523264
    %v394 = vsel %vm393, %v361, %v382
    %v395 = vsel %vm393, %v362, %v384
    %v396 = vsel %vm393, %v363, %v386
    %v397 = vsel %vm393, %v364, %v388
    %v399 = vsel %vm393, %v373, 0
    %v402 = vsel %vm393, %v374, 0
    %v405 = vsel %vm393, %v375, 0
    %v408 = vsel %vm393, %v376, 0
    %410 = vmatpush.msra.mxu0 %v344
    %411 = vmatpush.msra.mxu0 %v343
    %412 = vmatpush.msra.mxu0 %v342
    %413 = vmatpush.msra.mxu0 %v341
    %414 = vmatpush.msra.mxu0 %v340
    %415 = vmatpush.msra.mxu0 %v339
    %416 = vmatpush.msra.mxu0 %v338
    %417 = vmatpush.msra.mxu0 %v337
    %418 = vmatpush.msra.mxu0 %v336
    %419 = vmatpush.msra.mxu0 %v335
    %420 = vmatpush.msra.mxu0 %v334
    %421 = vmatpush.msra.mxu0 %v333
    %422 = vmatpush.msra.mxu0 %v332
    %423 = vmatpush.msra.mxu0 %v331
    %424 = vmatpush.msra.mxu0 %v330
    %425 = vmatpush.msra.mxu0 %v329
    %426 = vmatmul.f32.gmra.mxu0 %v394
    %v427 = vpop.f32.mrf.mxu0
    %v428 = vadd.f32 0.0, %v427
    %429 = vmatmul.f32.gmra.mxu0 %v395
    %v430 = vpop.f32.mrf.mxu0
    %v431 = vadd.f32 0.0, %v430
    %432 = vmatmul.f32.gmra.mxu0 %v396
    %v433 = vpop.f32.mrf.mxu0
    %v434 = vadd.f32 0.0, %v433
    %435 = vmatmul.f32.gmra.mxu0 %v397
    %v436 = vpop.f32.mrf.mxu0
    %v437 = vadd.f32 0.0, %v436
    %438 = vdwg.mxu0
    %439 = vmatpush.msra.mxu0 0.0
    %440 = vmatpush.msra.mxu0 0.0
    %441 = vmatpush.msra.mxu0 0.0
    %442 = vmatpush.msra.mxu0 0.0
    %443 = vmatpush.msra.mxu0 0.0
    %444 = vmatpush.msra.mxu0 0.0
    %445 = vmatpush.msra.mxu0 0.0
    %446 = vmatpush.msra.mxu0 0.0
    %447 = vmatpush.msra.mxu0 %v352
    %448 = vmatpush.msra.mxu0 %v351
    %449 = vmatpush.msra.mxu0 %v350
    %450 = vmatpush.msra.mxu0 %v349
    %451 = vmatpush.msra.mxu0 %v348
    %452 = vmatpush.msra.mxu0 %v347
    %453 = vmatpush.msra.mxu0 %v346
    %454 = vmatpush.msra.mxu0 %v345
    %455 = vmatmul.f32.gmra.mxu0 %v399
    %v456 = vpop.f32.mrf.mxu0
    %v457 = vadd.f32 %v428, %v456
    %458 = vmatmul.f32.gmra.mxu0 %v402
    %v459 = vpop.f32.mrf.mxu0
    %v460 = vadd.f32 %v431, %v459
    %461 = vmatmul.f32.gmra.mxu0 %v405
    %v462 = vpop.f32.mrf.mxu0
    %v463 = vadd.f32 %v434, %v462
    %464 = vmatmul.f32.gmra.mxu0 %v408
    %v465 = vpop.f32.mrf.mxu0
    %v466 = vadd.f32 %v437, %v465
    %467 = vdwg.mxu0
    %v468 = vadd.f32 %v106, %v457
    %v469 = vadd.f32 %v107, %v460
    %v470 = vadd.f32 %v108, %v463
    %v471 = vadd.f32 %v109, %v466
    %v472 = vld [vmem:[%s5] sm:$0x1]
    %v474 = vperm.slane %v472, 0
    %v476 = vadd.f32 %v468, %v474
    %v477 = vadd.f32 %v469, %v474
    %v478 = vadd.f32 %v470, %v474
    %v479 = vadd.f32 %v471, %v474
    %s480 = scalar_lea.vmem %s1, 16
    %v481 = vld [vmem:[%s480] sm:$0xff]
    %v482 = vld [vmem:[%s480 + $0x8] sm:$0xf]
    %v483 = vrot.slane %v476, 7
    %v484 = vrot.slane %v477, 7
    %v485 = vrot.slane %v478, 7
    %v486 = vrot.slane %v479, 7
    %v487 = vsel %vm116, %v485, %v486
    %v488 = vsel %vm116, %v484, %v485
    %v489 = vsel %vm116, %v483, %v484
    %v490 = vsel %vm116, %v486, %v483
    %v491 = vsel %vm125, 0.0, %v490
    %v492 = vsel %vm126, 0.0, %v489
    %v493 = vsel %vm127, 0.0, %v488
    %v494 = vsel %vm128, 0.0, %v487
    %v495 = vrot.slane %v476, 1
    %v496 = vrot.slane %v477, 1
    %v497 = vrot.slane %v478, 1
    %v498 = vrot.slane %v479, 1
    %v499 = vsel %vm137, %v497, %v498
    %v500 = vsel %vm137, %v496, %v497
    %v501 = vsel %vm137, %v495, %v496
    %v502 = vsel %vm137, %v498, %v495
    %v503 = vsel %vm146, 0.0, %v501
    %v504 = vsel %vm147, 0.0, %v500
    %v505 = vsel %vm148, 0.0, %v499
    %v506 = vsel %vm149, 0.0, %v502
    %511 = vrot.lane.b32.xlu0 %v476, 4
    %v512 = vpop.permute.xlu0 %511
    %513 = vrot.lane.b32.xlu0 %v477, 4
    %v514 = vpop.permute.xlu0 %513
    %515 = vrot.lane.b32.xlu0 %v478, 4
    %v516 = vpop.permute.xlu0 %515
    %517 = vrot.lane.b32.xlu0 %v479, 4
    %v518 = vpop.permute.xlu0 %517
    %527 = vrot.lane.b32.xlu0 %v503, 8
    %v528 = vpop.permute.xlu0 %527
    %529 = vrot.lane.b32.xlu0 %v504, 8
    %v530 = vpop.permute.xlu0 %529
    %531 = vrot.lane.b32.xlu0 %v505, 8
    %v532 = vpop.permute.xlu0 %531
    %533 = vrot.lane.b32.xlu0 %v506, 8
    %v534 = vpop.permute.xlu0 %533
    %v539 = vsel %vm186, %v491, %v512
    %v540 = vsel %vm186, %v492, %v514
    %v541 = vsel %vm186, %v493, %v516
    %v542 = vsel %vm186, %v494, %v518
    %v543 = vsel %vm191, %v539, %v528
    %v544 = vsel %vm191, %v540, %v530
    %v545 = vsel %vm191, %v541, %v532
    %v546 = vsel %vm191, %v542, %v534
    %v548 = vsel %vm196, %v543, 0
    %v551 = vsel %vm196, %v544, 0
    %v554 = vsel %vm196, %v545, 0
    %v557 = vsel %vm196, %v546, 0
    %v560 = vsel %vm209, %v482, 0
    %562 = vmatpush.msra.mxu0 0.0
    %563 = vmatpush.msra.mxu0 0.0
    %564 = vmatpush.msra.mxu0 0.0
    %565 = vmatpush.msra.mxu0 0.0
    %566 = vmatpush.msra.mxu0 0.0
    %567 = vmatpush.msra.mxu0 0.0
    %568 = vmatpush.msra.mxu0 0.0
    %569 = vmatpush.msra.mxu0 0.0
    %570 = vmatpush.msra.mxu0 0.0
    %571 = vmatpush.msra.mxu0 0.0
    %572 = vmatpush.msra.mxu0 0.0
    %573 = vmatpush.msra.mxu0 0.0
    %574 = vmatpush.msra.mxu0 0.0
    %575 = vmatpush.msra.mxu0 0.0
    %576 = vmatpush.msra.mxu0 %v560
    %577 = vmatpush.msra.mxu0 %v481
    %578 = vmatmul.f32.gmra.mxu0 %v548
    %v579 = vpop.f32.mrf.mxu0
    %v580 = vadd.f32 0.0, %v579
    %581 = vmatmul.f32.gmra.mxu0 %v551
    %v582 = vpop.f32.mrf.mxu0
    %v583 = vadd.f32 0.0, %v582
    %584 = vmatmul.f32.gmra.mxu0 %v554
    %v585 = vpop.f32.mrf.mxu0
    %v586 = vadd.f32 0.0, %v585
    %587 = vmatmul.f32.gmra.mxu0 %v557
    %v588 = vpop.f32.mrf.mxu0
    %v589 = vadd.f32 0.0, %v588
    %590 = vdwg.mxu0
    %s591 = scalar_lea.vmem %s2, 1
    %v592 = vld [vmem:[%s591] sm:$0x1]
    %s593 = scalar_lea.vmem %s3, 1
    %v594 = vld [vmem:[%s593] sm:$0x1]
    %595 = vmatpush.msra.mxu0 0.0
    %596 = vmatpush.msra.mxu0 0.0
    %597 = vmatpush.msra.mxu0 0.0
    %598 = vmatpush.msra.mxu0 0.0
    %599 = vmatpush.msra.mxu0 0.0
    %600 = vmatpush.msra.mxu0 0.0
    %601 = vmatpush.msra.mxu0 0.0
    %602 = vmatpush.msra.mxu0 0.0
    %603 = vmatpush.msra.mxu0 0.0
    %604 = vmatpush.msra.mxu0 0.0
    %605 = vmatpush.msra.mxu0 0.0
    %606 = vmatpush.msra.mxu0 0.0
    %607 = vmatpush.msra.mxu0 %v589
    %608 = vmatpush.msra.mxu0 %v586
    %609 = vmatpush.msra.mxu0 %v583
    %610 = vmatpush.msra.mxu0 %v580
    %611 = vmatmul.f32.gmra.mxu0 %v246
    %v612 = vpop.f32.mrf.mxu0
    %v613 = vadd.f32 0.0, %v612
    %614 = vdwg.mxu0
    %v615 = vmul.f32 %v613, 0.03125
    %v616 = vperm.slane %v615, 0
    %v617 = vsub.f32 %v580, %v616
    %v618 = vsub.f32 %v583, %v616
    %v619 = vsub.f32 %v586, %v616
    %v620 = vsub.f32 %v589, %v616
    %v621 = vmul.f32 %v617, %v617
    %v622 = vmul.f32 %v618, %v618
    %v623 = vmul.f32 %v619, %v619
    %v624 = vmul.f32 %v620, %v620
    %625 = vmatpush.msra.mxu0 0.0
    %626 = vmatpush.msra.mxu0 0.0
    %627 = vmatpush.msra.mxu0 0.0
    %628 = vmatpush.msra.mxu0 0.0
    %629 = vmatpush.msra.mxu0 0.0
    %630 = vmatpush.msra.mxu0 0.0
    %631 = vmatpush.msra.mxu0 0.0
    %632 = vmatpush.msra.mxu0 0.0
    %633 = vmatpush.msra.mxu0 0.0
    %634 = vmatpush.msra.mxu0 0.0
    %635 = vmatpush.msra.mxu0 0.0
    %636 = vmatpush.msra.mxu0 0.0
    %637 = vmatpush.msra.mxu0 %v624
    %638 = vmatpush.msra.mxu0 %v623
    %639 = vmatpush.msra.mxu0 %v622
    %640 = vmatpush.msra.mxu0 %v621
    %641 = vmatmul.f32.gmra.mxu0 %v246
    %v642 = vpop.f32.mrf.mxu0
    %v643 = vadd.f32 0.0, %v642
    %644 = vdwg.mxu0
    %v645 = vmul.f32 %v643, 0.03125
    %v646 = vadd.f32 %v645, 1e-05
    %v647 = vrsqrt.pop %v646
    %v648 = vmul.f32 %v647, %v646
    %v649 = vmul.f32 %v648, %v647
    %v650 = vmul.f32 0.5, %v649
    %v651 = vsub.f32 1.5, %v650
    %v652 = vmul.f32 %v647, %v651
    %vm653 = vweird.f32 %v646
    %vm654 = vweird.f32 %v647
    %vm655 = vmor %vm653, %vm654
    %v656 = vsel %vm655, %v647, %v652
    %v657 = vmul.f32 %v592, %v656
    %v659 = vperm.slane %v657, 0
    %v661 = vmul.f32 %v617, %v659
    %v662 = vmul.f32 %v618, %v659
    %v663 = vmul.f32 %v619, %v659
    %v664 = vmul.f32 %v620, %v659
    %v666 = vperm.slane %v594, 0
    %v668 = vadd.f32 %v661, %v666
    %v669 = vadd.f32 %v662, %v666
    %v670 = vadd.f32 %v663, %v666
    %v671 = vadd.f32 %v664, %v666
    %v672 = vmax.f32 %v668, 0.0
    %v673 = vmax.f32 %v669, 0.0
    %v674 = vmax.f32 %v670, 0.0
    %v675 = vmax.f32 %v671, 0.0
    %s676 = scalar_lea.vmem %s4, 192
    %v677 = vld [vmem:[%s676] sm:$0xff]
    %v678 = vld [vmem:[%s676 + $0x8] sm:$0xff]
    %v679 = vld [vmem:[%s676 + $0x10] sm:$0xff]
    %v680 = vld [vmem:[%s676 + $0x18] sm:$0xff]
    %v681 = vld [vmem:[%s676 + $0x20] sm:$0xff]
    %v682 = vld [vmem:[%s676 + $0x28] sm:$0xff]
    %v683 = vld [vmem:[%s676 + $0x30] sm:$0xff]
    %v684 = vld [vmem:[%s676 + $0x38] sm:$0xff]
    %v685 = vld [vmem:[%s676 + $0x40] sm:$0xff]
    %v686 = vld [vmem:[%s676 + $0x48] sm:$0xff]
    %v687 = vld [vmem:[%s676 + $0x50] sm:$0xff]
    %v688 = vld [vmem:[%s676 + $0x58] sm:$0xff]
    %v689 = vld [vmem:[%s676 + $0x60] sm:$0xff]
    %v690 = vld [vmem:[%s676 + $0x68] sm:$0xff]
    %v691 = vld [vmem:[%s676 + $0x70] sm:$0xff]
    %v692 = vld [vmem:[%s676 + $0x78] sm:$0xff]
    %v693 = vld [vmem:[%s676 + $0x80] sm:$0xff]
    %v694 = vld [vmem:[%s676 + $0x88] sm:$0xff]
    %v695 = vld [vmem:[%s676 + $0x90] sm:$0xff]
    %v696 = vld [vmem:[%s676 + $0x98] sm:$0xff]
    %v697 = vld [vmem:[%s676 + $0xa0] sm:$0xff]
    %v698 = vld [vmem:[%s676 + $0xa8] sm:$0xff]
    %v699 = vld [vmem:[%s676 + $0xb0] sm:$0xff]
    %v700 = vld [vmem:[%s676 + $0xb8] sm:$0xff]
    %v701 = vrot.slane %v672, 7
    %v702 = vrot.slane %v673, 7
    %v703 = vrot.slane %v674, 7
    %v704 = vrot.slane %v675, 7
    %v705 = vsel %vm116, %v703, %v704
    %v706 = vsel %vm116, %v702, %v703
    %v707 = vsel %vm116, %v701, %v702
    %v708 = vsel %vm116, %v704, %v701
    %v709 = vsel %vm125, 0.0, %v708
    %v710 = vsel %vm126, 0.0, %v707
    %v711 = vsel %vm127, 0.0, %v706
    %v712 = vsel %vm128, 0.0, %v705
    %v713 = vrot.slane %v672, 1
    %v714 = vrot.slane %v673, 1
    %v715 = vrot.slane %v674, 1
    %v716 = vrot.slane %v675, 1
    %v717 = vsel %vm137, %v715, %v716
    %v718 = vsel %vm137, %v714, %v715
    %v719 = vsel %vm137, %v713, %v714
    %v720 = vsel %vm137, %v716, %v713
    %v721 = vsel %vm146, 0.0, %v719
    %v722 = vsel %vm147, 0.0, %v718
    %v723 = vsel %vm148, 0.0, %v717
    %v724 = vsel %vm149, 0.0, %v720
    %729 = vrot.lane.b32.xlu0 %v672, 64
    %v730 = vpop.permute.xlu0 %729
    %731 = vrot.lane.b32.xlu0 %v673, 64
    %v732 = vpop.permute.xlu0 %731
    %733 = vrot.lane.b32.xlu0 %v674, 64
    %v734 = vpop.permute.xlu0 %733
    %735 = vrot.lane.b32.xlu0 %v675, 64
    %v736 = vpop.permute.xlu0 %735
    %v741 = vsel %vm393, %v709, %v730
    %v742 = vsel %vm393, %v710, %v732
    %v743 = vsel %vm393, %v711, %v734
    %v744 = vsel %vm393, %v712, %v736
    %v746 = vsel %vm393, %v721, 0
    %v749 = vsel %vm393, %v722, 0
    %v752 = vsel %vm393, %v723, 0
    %v755 = vsel %vm393, %v724, 0
    %757 = vmatpush.msra.mxu0 %v692
    %758 = vmatpush.msra.mxu0 %v691
    %759 = vmatpush.msra.mxu0 %v690
    %760 = vmatpush.msra.mxu0 %v689
    %761 = vmatpush.msra.mxu0 %v688
    %762 = vmatpush.msra.mxu0 %v687
    %763 = vmatpush.msra.mxu0 %v686
    %764 = vmatpush.msra.mxu0 %v685
    %765 = vmatpush.msra.mxu0 %v684
    %766 = vmatpush.msra.mxu0 %v683
    %767 = vmatpush.msra.mxu0 %v682
    %768 = vmatpush.msra.mxu0 %v681
    %769 = vmatpush.msra.mxu0 %v680
    %770 = vmatpush.msra.mxu0 %v679
    %771 = vmatpush.msra.mxu0 %v678
    %772 = vmatpush.msra.mxu0 %v677
    %773 = vmatmul.f32.gmra.mxu0 %v741
    %v774 = vpop.f32.mrf.mxu0
    %v775 = vadd.f32 0.0, %v774
    %776 = vmatmul.f32.gmra.mxu0 %v742
    %v777 = vpop.f32.mrf.mxu0
    %v778 = vadd.f32 0.0, %v777
    %779 = vmatmul.f32.gmra.mxu0 %v743
    %v780 = vpop.f32.mrf.mxu0
    %v781 = vadd.f32 0.0, %v780
    %782 = vmatmul.f32.gmra.mxu0 %v744
    %v783 = vpop.f32.mrf.mxu0
    %v784 = vadd.f32 0.0, %v783
    %785 = vdwg.mxu0
    %786 = vmatpush.msra.mxu0 0.0
    %787 = vmatpush.msra.mxu0 0.0
    %788 = vmatpush.msra.mxu0 0.0
    %789 = vmatpush.msra.mxu0 0.0
    %790 = vmatpush.msra.mxu0 0.0
    %791 = vmatpush.msra.mxu0 0.0
    %792 = vmatpush.msra.mxu0 0.0
    %793 = vmatpush.msra.mxu0 0.0
    %794 = vmatpush.msra.mxu0 %v700
    %795 = vmatpush.msra.mxu0 %v699
    %796 = vmatpush.msra.mxu0 %v698
    %797 = vmatpush.msra.mxu0 %v697
    %798 = vmatpush.msra.mxu0 %v696
    %799 = vmatpush.msra.mxu0 %v695
    %800 = vmatpush.msra.mxu0 %v694
    %801 = vmatpush.msra.mxu0 %v693
    %802 = vmatmul.f32.gmra.mxu0 %v746
    %v803 = vpop.f32.mrf.mxu0
    %v804 = vadd.f32 %v775, %v803
    %805 = vmatmul.f32.gmra.mxu0 %v749
    %v806 = vpop.f32.mrf.mxu0
    %v807 = vadd.f32 %v778, %v806
    %808 = vmatmul.f32.gmra.mxu0 %v752
    %v809 = vpop.f32.mrf.mxu0
    %v810 = vadd.f32 %v781, %v809
    %811 = vmatmul.f32.gmra.mxu0 %v755
    %v812 = vpop.f32.mrf.mxu0
    %v813 = vadd.f32 %v784, %v812
    %814 = vdwg.mxu0
    %v815 = vadd.f32 %v476, %v804
    %v816 = vadd.f32 %v477, %v807
    %v817 = vadd.f32 %v478, %v810
    %v818 = vadd.f32 %v479, %v813
    %s819 = scalar_lea.vmem %s5, 1
    %v820 = vld [vmem:[%s819] sm:$0x1]
    %v822 = vperm.slane %v820, 0
    %v824 = vadd.f32 %v815, %v822
    %v825 = vadd.f32 %v816, %v822
    %v826 = vadd.f32 %v817, %v822
    %v827 = vadd.f32 %v818, %v822
    %s828 = scalar_lea.vmem %s1, 32
    %v829 = vld [vmem:[%s828] sm:$0xff]
    %v830 = vld [vmem:[%s828 + $0x8] sm:$0xf]
    %v831 = vrot.slane %v824, 7
    %v832 = vrot.slane %v825, 7
    %v833 = vrot.slane %v826, 7
    %v834 = vrot.slane %v827, 7
    %v835 = vsel %vm116, %v833, %v834
    %v836 = vsel %vm116, %v832, %v833
    %v837 = vsel %vm116, %v831, %v832
    %v838 = vsel %vm116, %v834, %v831
    %v839 = vsel %vm125, 0.0, %v838
    %v840 = vsel %vm126, 0.0, %v837
    %v841 = vsel %vm127, 0.0, %v836
    %v842 = vsel %vm128, 0.0, %v835
    %v843 = vrot.slane %v824, 1
    %v844 = vrot.slane %v825, 1
    %v845 = vrot.slane %v826, 1
    %v846 = vrot.slane %v827, 1
    %v847 = vsel %vm137, %v845, %v846
    %v848 = vsel %vm137, %v844, %v845
    %v849 = vsel %vm137, %v843, %v844
    %v850 = vsel %vm137, %v846, %v843
    %v851 = vsel %vm146, 0.0, %v849
    %v852 = vsel %vm147, 0.0, %v848
    %v853 = vsel %vm148, 0.0, %v847
    %v854 = vsel %vm149, 0.0, %v850
    %859 = vrot.lane.b32.xlu0 %v824, 4
    %v860 = vpop.permute.xlu0 %859
    %861 = vrot.lane.b32.xlu0 %v825, 4
    %v862 = vpop.permute.xlu0 %861
    %863 = vrot.lane.b32.xlu0 %v826, 4
    %v864 = vpop.permute.xlu0 %863
    %865 = vrot.lane.b32.xlu0 %v827, 4
    %v866 = vpop.permute.xlu0 %865
    %875 = vrot.lane.b32.xlu0 %v851, 8
    %v876 = vpop.permute.xlu0 %875
    %877 = vrot.lane.b32.xlu0 %v852, 8
    %v878 = vpop.permute.xlu0 %877
    %879 = vrot.lane.b32.xlu0 %v853, 8
    %v880 = vpop.permute.xlu0 %879
    %881 = vrot.lane.b32.xlu0 %v854, 8
    %v882 = vpop.permute.xlu0 %881
    %v887 = vsel %vm186, %v839, %v860
    %v888 = vsel %vm186, %v840, %v862
    %v889 = vsel %vm186, %v841, %v864
    %v890 = vsel %vm186, %v842, %v866
    %v891 = vsel %vm191, %v887, %v876
    %v892 = vsel %vm191, %v888, %v878
    %v893 = vsel %vm191, %v889, %v880
    %v894 = vsel %vm191, %v890, %v882
    %v896 = vsel %vm196, %v891, 0
    %v899 = vsel %vm196, %v892, 0
    %v902 = vsel %vm196, %v893, 0
    %v905 = vsel %vm196, %v894, 0
    %v908 = vsel %vm209, %v830, 0
    %910 = vmatpush.msra.mxu0 0.0
    %911 = vmatpush.msra.mxu0 0.0
    %912 = vmatpush.msra.mxu0 0.0
    %913 = vmatpush.msra.mxu0 0.0
    %914 = vmatpush.msra.mxu0 0.0
    %915 = vmatpush.msra.mxu0 0.0
    %916 = vmatpush.msra.mxu0 0.0
    %917 = vmatpush.msra.mxu0 0.0
    %918 = vmatpush.msra.mxu0 0.0
    %919 = vmatpush.msra.mxu0 0.0
    %920 = vmatpush.msra.mxu0 0.0
    %921 = vmatpush.msra.mxu0 0.0
    %922 = vmatpush.msra.mxu0 0.0
    %923 = vmatpush.msra.mxu0 0.0
    %924 = vmatpush.msra.mxu0 %v908
    %925 = vmatpush.msra.mxu0 %v829
    %926 = vmatmul.f32.gmra.mxu0 %v896
    %v927 = vpop.f32.mrf.mxu0
    %v928 = vadd.f32 0.0, %v927
    %929 = vmatmul.f32.gmra.mxu0 %v899
    %v930 = vpop.f32.mrf.mxu0
    %v931 = vadd.f32 0.0, %v930
    %932 = vmatmul.f32.gmra.mxu0 %v902
    %v933 = vpop.f32.mrf.mxu0
    %v934 = vadd.f32 0.0, %v933
    %935 = vmatmul.f32.gmra.mxu0 %v905
    %v936 = vpop.f32.mrf.mxu0
    %v937 = vadd.f32 0.0, %v936
    %938 = vdwg.mxu0
    %s939 = scalar_lea.vmem %s2, 2
    %v940 = vld [vmem:[%s939] sm:$0x1]
    %s941 = scalar_lea.vmem %s3, 2
    %v942 = vld [vmem:[%s941] sm:$0x1]
    %943 = vmatpush.msra.mxu0 0.0
    %944 = vmatpush.msra.mxu0 0.0
    %945 = vmatpush.msra.mxu0 0.0
    %946 = vmatpush.msra.mxu0 0.0
    %947 = vmatpush.msra.mxu0 0.0
    %948 = vmatpush.msra.mxu0 0.0
    %949 = vmatpush.msra.mxu0 0.0
    %950 = vmatpush.msra.mxu0 0.0
    %951 = vmatpush.msra.mxu0 0.0
    %952 = vmatpush.msra.mxu0 0.0
    %953 = vmatpush.msra.mxu0 0.0
    %954 = vmatpush.msra.mxu0 0.0
    %955 = vmatpush.msra.mxu0 %v937
    %956 = vmatpush.msra.mxu0 %v934
    %957 = vmatpush.msra.mxu0 %v931
    %958 = vmatpush.msra.mxu0 %v928
    %959 = vmatmul.f32.gmra.mxu0 %v246
    %v960 = vpop.f32.mrf.mxu0
    %v961 = vadd.f32 0.0, %v960
    %962 = vdwg.mxu0
    %v963 = vmul.f32 %v961, 0.03125
    %v964 = vperm.slane %v963, 0
    %v965 = vsub.f32 %v928, %v964
    %v966 = vsub.f32 %v931, %v964
    %v967 = vsub.f32 %v934, %v964
    %v968 = vsub.f32 %v937, %v964
    %v969 = vmul.f32 %v965, %v965
    %v970 = vmul.f32 %v966, %v966
    %v971 = vmul.f32 %v967, %v967
    %v972 = vmul.f32 %v968, %v968
    %973 = vmatpush.msra.mxu0 0.0
    %974 = vmatpush.msra.mxu0 0.0
    %975 = vmatpush.msra.mxu0 0.0
    %976 = vmatpush.msra.mxu0 0.0
    %977 = vmatpush.msra.mxu0 0.0
    %978 = vmatpush.msra.mxu0 0.0
    %979 = vmatpush.msra.mxu0 0.0
    %980 = vmatpush.msra.mxu0 0.0
    %981 = vmatpush.msra.mxu0 0.0
    %982 = vmatpush.msra.mxu0 0.0
    %983 = vmatpush.msra.mxu0 0.0
    %984 = vmatpush.msra.mxu0 0.0
    %985 = vmatpush.msra.mxu0 %v972
    %986 = vmatpush.msra.mxu0 %v971
    %987 = vmatpush.msra.mxu0 %v970
    %988 = vmatpush.msra.mxu0 %v969
    %989 = vmatmul.f32.gmra.mxu0 %v246
    %v990 = vpop.f32.mrf.mxu0
    %v991 = vadd.f32 0.0, %v990
    %992 = vdwg.mxu0
    %v993 = vmul.f32 %v991, 0.03125
    %v994 = vadd.f32 %v993, 1e-05
    %v995 = vrsqrt.pop %v994
    %v996 = vmul.f32 %v995, %v994
    %v997 = vmul.f32 %v996, %v995
    %v998 = vmul.f32 0.5, %v997
    %v999 = vsub.f32 1.5, %v998
    %v1000 = vmul.f32 %v995, %v999
    %vm1001 = vweird.f32 %v994
    %vm1002 = vweird.f32 %v995
    %vm1003 = vmor %vm1001, %vm1002
    %v1004 = vsel %vm1003, %v995, %v1000
    %v1005 = vmul.f32 %v940, %v1004
    %v1007 = vperm.slane %v1005, 0
    %v1009 = vmul.f32 %v965, %v1007
    %v1010 = vmul.f32 %v966, %v1007
    %v1011 = vmul.f32 %v967, %v1007
    %v1012 = vmul.f32 %v968, %v1007
    %v1014 = vperm.slane %v942, 0
    %v1016 = vadd.f32 %v1009, %v1014
    %v1017 = vadd.f32 %v1010, %v1014
    %v1018 = vadd.f32 %v1011, %v1014
    %v1019 = vadd.f32 %v1012, %v1014
    %v1020 = vmax.f32 %v1016, 0.0
    %v1021 = vmax.f32 %v1017, 0.0
    %v1022 = vmax.f32 %v1018, 0.0
    %v1023 = vmax.f32 %v1019, 0.0
    %s1024 = scalar_lea.vmem %s4, 384
    %v1025 = vld [vmem:[%s1024] sm:$0xff]
    %v1026 = vld [vmem:[%s1024 + $0x8] sm:$0xff]
    %v1027 = vld [vmem:[%s1024 + $0x10] sm:$0xff]
    %v1028 = vld [vmem:[%s1024 + $0x18] sm:$0xff]
    %v1029 = vld [vmem:[%s1024 + $0x20] sm:$0xff]
    %v1030 = vld [vmem:[%s1024 + $0x28] sm:$0xff]
    %v1031 = vld [vmem:[%s1024 + $0x30] sm:$0xff]
    %v1032 = vld [vmem:[%s1024 + $0x38] sm:$0xff]
    %v1033 = vld [vmem:[%s1024 + $0x40] sm:$0xff]
    %v1034 = vld [vmem:[%s1024 + $0x48] sm:$0xff]
    %v1035 = vld [vmem:[%s1024 + $0x50] sm:$0xff]
    %v1036 = vld [vmem:[%s1024 + $0x58] sm:$0xff]
    %v1037 = vld [vmem:[%s1024 + $0x60] sm:$0xff]
    %v1038 = vld [vmem:[%s1024 + $0x68] sm:$0xff]
    %v1039 = vld [vmem:[%s1024 + $0x70] sm:$0xff]
    %v1040 = vld [vmem:[%s1024 + $0x78] sm:$0xff]
    %v1041 = vld [vmem:[%s1024 + $0x80] sm:$0xff]
    %v1042 = vld [vmem:[%s1024 + $0x88] sm:$0xff]
    %v1043 = vld [vmem:[%s1024 + $0x90] sm:$0xff]
    %v1044 = vld [vmem:[%s1024 + $0x98] sm:$0xff]
    %v1045 = vld [vmem:[%s1024 + $0xa0] sm:$0xff]
    %v1046 = vld [vmem:[%s1024 + $0xa8] sm:$0xff]
    %v1047 = vld [vmem:[%s1024 + $0xb0] sm:$0xff]
    %v1048 = vld [vmem:[%s1024 + $0xb8] sm:$0xff]
    %v1049 = vrot.slane %v1020, 7
    %v1050 = vrot.slane %v1021, 7
    %v1051 = vrot.slane %v1022, 7
    %v1052 = vrot.slane %v1023, 7
    %v1053 = vsel %vm116, %v1051, %v1052
    %v1054 = vsel %vm116, %v1050, %v1051
    %v1055 = vsel %vm116, %v1049, %v1050
    %v1056 = vsel %vm116, %v1052, %v1049
    %v1057 = vsel %vm125, 0.0, %v1056
    %v1058 = vsel %vm126, 0.0, %v1055
    %v1059 = vsel %vm127, 0.0, %v1054
    %v1060 = vsel %vm128, 0.0, %v1053
    %v1061 = vrot.slane %v1020, 1
    %v1062 = vrot.slane %v1021, 1
    %v1063 = vrot.slane %v1022, 1
    %v1064 = vrot.slane %v1023, 1
    %v1065 = vsel %vm137, %v1063, %v1064
    %v1066 = vsel %vm137, %v1062, %v1063
    %v1067 = vsel %vm137, %v1061, %v1062
    %v1068 = vsel %vm137, %v1064, %v1061
    %v1069 = vsel %vm146, 0.0, %v1067
    %v1070 = vsel %vm147, 0.0, %v1066
    %v1071 = vsel %vm148, 0.0, %v1065
    %v1072 = vsel %vm149, 0.0, %v1068
    %1077 = vrot.lane.b32.xlu0 %v1020, 64
    %v1078 = vpop.permute.xlu0 %1077
    %1079 = vrot.lane.b32.xlu0 %v1021, 64
    %v1080 = vpop.permute.xlu0 %1079
    %1081 = vrot.lane.b32.xlu0 %v1022, 64
    %v1082 = vpop.permute.xlu0 %1081
    %1083 = vrot.lane.b32.xlu0 %v1023, 64
    %v1084 = vpop.permute.xlu0 %1083
    %v1089 = vsel %vm393, %v1057, %v1078
    %v1090 = vsel %vm393, %v1058, %v1080
    %v1091 = vsel %vm393, %v1059, %v1082
    %v1092 = vsel %vm393, %v1060, %v1084
    %v1094 = vsel %vm393, %v1069, 0
    %v1097 = vsel %vm393, %v1070, 0
    %v1100 = vsel %vm393, %v1071, 0
    %v1103 = vsel %vm393, %v1072, 0
    %1105 = vmatpush.msra.mxu0 %v1040
    %1106 = vmatpush.msra.mxu0 %v1039
    %1107 = vmatpush.msra.mxu0 %v1038
    %1108 = vmatpush.msra.mxu0 %v1037
    %1109 = vmatpush.msra.mxu0 %v1036
    %1110 = vmatpush.msra.mxu0 %v1035
    %1111 = vmatpush.msra.mxu0 %v1034
    %1112 = vmatpush.msra.mxu0 %v1033
    %1113 = vmatpush.msra.mxu0 %v1032
    %1114 = vmatpush.msra.mxu0 %v1031
    %1115 = vmatpush.msra.mxu0 %v1030
    %1116 = vmatpush.msra.mxu0 %v1029
    %1117 = vmatpush.msra.mxu0 %v1028
    %1118 = vmatpush.msra.mxu0 %v1027
    %1119 = vmatpush.msra.mxu0 %v1026
    %1120 = vmatpush.msra.mxu0 %v1025
    %1121 = vmatmul.f32.gmra.mxu0 %v1089
    %v1122 = vpop.f32.mrf.mxu0
    %v1123 = vadd.f32 0.0, %v1122
    %1124 = vmatmul.f32.gmra.mxu0 %v1090
    %v1125 = vpop.f32.mrf.mxu0
    %v1126 = vadd.f32 0.0, %v1125
    %1127 = vmatmul.f32.gmra.mxu0 %v1091
    %v1128 = vpop.f32.mrf.mxu0
    %v1129 = vadd.f32 0.0, %v1128
    %1130 = vmatmul.f32.gmra.mxu0 %v1092
    %v1131 = vpop.f32.mrf.mxu0
    %v1132 = vadd.f32 0.0, %v1131
    %1133 = vdwg.mxu0
    %1134 = vmatpush.msra.mxu0 0.0
    %1135 = vmatpush.msra.mxu0 0.0
    %1136 = vmatpush.msra.mxu0 0.0
    %1137 = vmatpush.msra.mxu0 0.0
    %1138 = vmatpush.msra.mxu0 0.0
    %1139 = vmatpush.msra.mxu0 0.0
    %1140 = vmatpush.msra.mxu0 0.0
    %1141 = vmatpush.msra.mxu0 0.0
    %1142 = vmatpush.msra.mxu0 %v1048
    %1143 = vmatpush.msra.mxu0 %v1047
    %1144 = vmatpush.msra.mxu0 %v1046
    %1145 = vmatpush.msra.mxu0 %v1045
    %1146 = vmatpush.msra.mxu0 %v1044
    %1147 = vmatpush.msra.mxu0 %v1043
    %1148 = vmatpush.msra.mxu0 %v1042
    %1149 = vmatpush.msra.mxu0 %v1041
    %1150 = vmatmul.f32.gmra.mxu0 %v1094
    %v1151 = vpop.f32.mrf.mxu0
    %v1152 = vadd.f32 %v1123, %v1151
    %1153 = vmatmul.f32.gmra.mxu0 %v1097
    %v1154 = vpop.f32.mrf.mxu0
    %v1155 = vadd.f32 %v1126, %v1154
    %1156 = vmatmul.f32.gmra.mxu0 %v1100
    %v1157 = vpop.f32.mrf.mxu0
    %v1158 = vadd.f32 %v1129, %v1157
    %1159 = vmatmul.f32.gmra.mxu0 %v1103
    %v1160 = vpop.f32.mrf.mxu0
    %v1161 = vadd.f32 %v1132, %v1160
    %1162 = vdwg.mxu0
    %v1163 = vadd.f32 %v824, %v1152
    %v1164 = vadd.f32 %v825, %v1155
    %v1165 = vadd.f32 %v826, %v1158
    %v1166 = vadd.f32 %v827, %v1161
    %s1167 = scalar_lea.vmem %s5, 2
    %v1168 = vld [vmem:[%s1167] sm:$0x1]
    %v1170 = vperm.slane %v1168, 0
    %v1172 = vadd.f32 %v1163, %v1170
    %v1173 = vadd.f32 %v1164, %v1170
    %v1174 = vadd.f32 %v1165, %v1170
    %v1175 = vadd.f32 %v1166, %v1170
    %s1176 = scalar_lea.vmem %s1, 48
    %v1177 = vld [vmem:[%s1176] sm:$0xff]
    %v1178 = vld [vmem:[%s1176 + $0x8] sm:$0xf]
    %v1179 = vrot.slane %v1172, 7
    %v1180 = vrot.slane %v1173, 7
    %v1181 = vrot.slane %v1174, 7
    %v1182 = vrot.slane %v1175, 7
    %v1183 = vsel %vm116, %v1181, %v1182
    %v1184 = vsel %vm116, %v1180, %v1181
    %v1185 = vsel %vm116, %v1179, %v1180
    %v1186 = vsel %vm116, %v1182, %v1179
    %v1187 = vsel %vm125, 0.0, %v1186
    %v1188 = vsel %vm126, 0.0, %v1185
    %v1189 = vsel %vm127, 0.0, %v1184
    %v1190 = vsel %vm128, 0.0, %v1183
    %v1191 = vrot.slane %v1172, 1
    %v1192 = vrot.slane %v1173, 1
    %v1193 = vrot.slane %v1174, 1
    %v1194 = vrot.slane %v1175, 1
    %v1195 = vsel %vm137, %v1193, %v1194
    %v1196 = vsel %vm137, %v1192, %v1193
    %v1197 = vsel %vm137, %v1191, %v1192
    %v1198 = vsel %vm137, %v1194, %v1191
    %v1199 = vsel %vm146, 0.0, %v1197
    %v1200 = vsel %vm147, 0.0, %v1196
    %v1201 = vsel %vm148, 0.0, %v1195
    %v1202 = vsel %vm149, 0.0, %v1198
    %1207 = vrot.lane.b32.xlu0 %v1172, 4
    %v1208 = vpop.permute.xlu0 %1207
    %1209 = vrot.lane.b32.xlu0 %v1173, 4
    %v1210 = vpop.permute.xlu0 %1209
    %1211 = vrot.lane.b32.xlu0 %v1174, 4
    %v1212 = vpop.permute.xlu0 %1211
    %1213 = vrot.lane.b32.xlu0 %v1175, 4
    %v1214 = vpop.permute.xlu0 %1213
    %1223 = vrot.lane.b32.xlu0 %v1199, 8
    %v1224 = vpop.permute.xlu0 %1223
    %1225 = vrot.lane.b32.xlu0 %v1200, 8
    %v1226 = vpop.permute.xlu0 %1225
    %1227 = vrot.lane.b32.xlu0 %v1201, 8
    %v1228 = vpop.permute.xlu0 %1227
    %1229 = vrot.lane.b32.xlu0 %v1202, 8
    %v1230 = vpop.permute.xlu0 %1229
    %v1235 = vsel %vm186, %v1187, %v1208
    %v1236 = vsel %vm186, %v1188, %v1210
    %v1237 = vsel %vm186, %v1189, %v1212
    %v1238 = vsel %vm186, %v1190, %v1214
    %v1239 = vsel %vm191, %v1235, %v1224
    %v1240 = vsel %vm191, %v1236, %v1226
    %v1241 = vsel %vm191, %v1237, %v1228
    %v1242 = vsel %vm191, %v1238, %v1230
    %v1244 = vsel %vm196, %v1239, 0
    %v1247 = vsel %vm196, %v1240, 0
    %v1250 = vsel %vm196, %v1241, 0
    %v1253 = vsel %vm196, %v1242, 0
    %v1256 = vsel %vm209, %v1178, 0
    %1258 = vmatpush.msra.mxu0 0.0
    %1259 = vmatpush.msra.mxu0 0.0
    %1260 = vmatpush.msra.mxu0 0.0
    %1261 = vmatpush.msra.mxu0 0.0
    %1262 = vmatpush.msra.mxu0 0.0
    %1263 = vmatpush.msra.mxu0 0.0
    %1264 = vmatpush.msra.mxu0 0.0
    %1265 = vmatpush.msra.mxu0 0.0
    %1266 = vmatpush.msra.mxu0 0.0
    %1267 = vmatpush.msra.mxu0 0.0
    %1268 = vmatpush.msra.mxu0 0.0
    %1269 = vmatpush.msra.mxu0 0.0
    %1270 = vmatpush.msra.mxu0 0.0
    %1271 = vmatpush.msra.mxu0 0.0
    %1272 = vmatpush.msra.mxu0 %v1256
    %1273 = vmatpush.msra.mxu0 %v1177
    %1274 = vmatmul.f32.gmra.mxu0 %v1244
    %v1275 = vpop.f32.mrf.mxu0
    %v1276 = vadd.f32 0.0, %v1275
    %1277 = vmatmul.f32.gmra.mxu0 %v1247
    %v1278 = vpop.f32.mrf.mxu0
    %v1279 = vadd.f32 0.0, %v1278
    %1280 = vmatmul.f32.gmra.mxu0 %v1250
    %v1281 = vpop.f32.mrf.mxu0
    %v1282 = vadd.f32 0.0, %v1281
    %1283 = vmatmul.f32.gmra.mxu0 %v1253
    %v1284 = vpop.f32.mrf.mxu0
    %v1285 = vadd.f32 0.0, %v1284
    %1286 = vdwg.mxu0
    %s1287 = scalar_lea.vmem %s2, 3
    %v1288 = vld [vmem:[%s1287] sm:$0x1]
    %s1289 = scalar_lea.vmem %s3, 3
    %v1290 = vld [vmem:[%s1289] sm:$0x1]
    %1291 = vmatpush.msra.mxu0 0.0
    %1292 = vmatpush.msra.mxu0 0.0
    %1293 = vmatpush.msra.mxu0 0.0
    %1294 = vmatpush.msra.mxu0 0.0
    %1295 = vmatpush.msra.mxu0 0.0
    %1296 = vmatpush.msra.mxu0 0.0
    %1297 = vmatpush.msra.mxu0 0.0
    %1298 = vmatpush.msra.mxu0 0.0
    %1299 = vmatpush.msra.mxu0 0.0
    %1300 = vmatpush.msra.mxu0 0.0
    %1301 = vmatpush.msra.mxu0 0.0
    %1302 = vmatpush.msra.mxu0 0.0
    %1303 = vmatpush.msra.mxu0 %v1285
    %1304 = vmatpush.msra.mxu0 %v1282
    %1305 = vmatpush.msra.mxu0 %v1279
    %1306 = vmatpush.msra.mxu0 %v1276
    %1307 = vmatmul.f32.gmra.mxu0 %v246
    %v1308 = vpop.f32.mrf.mxu0
    %v1309 = vadd.f32 0.0, %v1308
    %1310 = vdwg.mxu0
    %v1311 = vmul.f32 %v1309, 0.03125
    %v1312 = vperm.slane %v1311, 0
    %v1313 = vsub.f32 %v1276, %v1312
    %v1314 = vsub.f32 %v1279, %v1312
    %v1315 = vsub.f32 %v1282, %v1312
    %v1316 = vsub.f32 %v1285, %v1312
    %v1317 = vmul.f32 %v1313, %v1313
    %v1318 = vmul.f32 %v1314, %v1314
    %v1319 = vmul.f32 %v1315, %v1315
    %v1320 = vmul.f32 %v1316, %v1316
    %1321 = vmatpush.msra.mxu0 0.0
    %1322 = vmatpush.msra.mxu0 0.0
    %1323 = vmatpush.msra.mxu0 0.0
    %1324 = vmatpush.msra.mxu0 0.0
    %1325 = vmatpush.msra.mxu0 0.0
    %1326 = vmatpush.msra.mxu0 0.0
    %1327 = vmatpush.msra.mxu0 0.0
    %1328 = vmatpush.msra.mxu0 0.0
    %1329 = vmatpush.msra.mxu0 0.0
    %1330 = vmatpush.msra.mxu0 0.0
    %1331 = vmatpush.msra.mxu0 0.0
    %1332 = vmatpush.msra.mxu0 0.0
    %1333 = vmatpush.msra.mxu0 %v1320
    %1334 = vmatpush.msra.mxu0 %v1319
    %1335 = vmatpush.msra.mxu0 %v1318
    %1336 = vmatpush.msra.mxu0 %v1317
    %1337 = vmatmul.f32.gmra.mxu0 %v246
    %v1338 = vpop.f32.mrf.mxu0
    %v1339 = vadd.f32 0.0, %v1338
    %1340 = vdwg.mxu0
    %v1341 = vmul.f32 %v1339, 0.03125
    %v1342 = vadd.f32 %v1341, 1e-05
    %v1343 = vrsqrt.pop %v1342
    %v1344 = vmul.f32 %v1343, %v1342
    %v1345 = vmul.f32 %v1344, %v1343
    %v1346 = vmul.f32 0.5, %v1345
    %v1347 = vsub.f32 1.5, %v1346
    %v1348 = vmul.f32 %v1343, %v1347
    %vm1349 = vweird.f32 %v1342
    %vm1350 = vweird.f32 %v1343
    %vm1351 = vmor %vm1349, %vm1350
    %v1352 = vsel %vm1351, %v1343, %v1348
    %v1353 = vmul.f32 %v1288, %v1352
    %v1355 = vperm.slane %v1353, 0
    %v1357 = vmul.f32 %v1313, %v1355
    %v1358 = vmul.f32 %v1314, %v1355
    %v1359 = vmul.f32 %v1315, %v1355
    %v1360 = vmul.f32 %v1316, %v1355
    %v1362 = vperm.slane %v1290, 0
    %v1364 = vadd.f32 %v1357, %v1362
    %v1365 = vadd.f32 %v1358, %v1362
    %v1366 = vadd.f32 %v1359, %v1362
    %v1367 = vadd.f32 %v1360, %v1362
    %v1368 = vmax.f32 %v1364, 0.0
    %v1369 = vmax.f32 %v1365, 0.0
    %v1370 = vmax.f32 %v1366, 0.0
    %v1371 = vmax.f32 %v1367, 0.0
    %s1372 = scalar_lea.vmem %s4, 576
    %v1373 = vld [vmem:[%s1372] sm:$0xff]
    %v1374 = vld [vmem:[%s1372 + $0x8] sm:$0xff]
    %v1375 = vld [vmem:[%s1372 + $0x10] sm:$0xff]
    %v1376 = vld [vmem:[%s1372 + $0x18] sm:$0xff]
    %v1377 = vld [vmem:[%s1372 + $0x20] sm:$0xff]
    %v1378 = vld [vmem:[%s1372 + $0x28] sm:$0xff]
    %v1379 = vld [vmem:[%s1372 + $0x30] sm:$0xff]
    %v1380 = vld [vmem:[%s1372 + $0x38] sm:$0xff]
    %v1381 = vld [vmem:[%s1372 + $0x40] sm:$0xff]
    %v1382 = vld [vmem:[%s1372 + $0x48] sm:$0xff]
    %v1383 = vld [vmem:[%s1372 + $0x50] sm:$0xff]
    %v1384 = vld [vmem:[%s1372 + $0x58] sm:$0xff]
    %v1385 = vld [vmem:[%s1372 + $0x60] sm:$0xff]
    %v1386 = vld [vmem:[%s1372 + $0x68] sm:$0xff]
    %v1387 = vld [vmem:[%s1372 + $0x70] sm:$0xff]
    %v1388 = vld [vmem:[%s1372 + $0x78] sm:$0xff]
    %v1389 = vld [vmem:[%s1372 + $0x80] sm:$0xff]
    %v1390 = vld [vmem:[%s1372 + $0x88] sm:$0xff]
    %v1391 = vld [vmem:[%s1372 + $0x90] sm:$0xff]
    %v1392 = vld [vmem:[%s1372 + $0x98] sm:$0xff]
    %v1393 = vld [vmem:[%s1372 + $0xa0] sm:$0xff]
    %v1394 = vld [vmem:[%s1372 + $0xa8] sm:$0xff]
    %v1395 = vld [vmem:[%s1372 + $0xb0] sm:$0xff]
    %v1396 = vld [vmem:[%s1372 + $0xb8] sm:$0xff]
    %v1397 = vrot.slane %v1368, 7
    %v1398 = vrot.slane %v1369, 7
    %v1399 = vrot.slane %v1370, 7
    %v1400 = vrot.slane %v1371, 7
    %v1401 = vsel %vm116, %v1399, %v1400
    %v1402 = vsel %vm116, %v1398, %v1399
    %v1403 = vsel %vm116, %v1397, %v1398
    %v1404 = vsel %vm116, %v1400, %v1397
    %v1405 = vsel %vm125, 0.0, %v1404
    %v1406 = vsel %vm126, 0.0, %v1403
    %v1407 = vsel %vm127, 0.0, %v1402
    %v1408 = vsel %vm128, 0.0, %v1401
    %v1409 = vrot.slane %v1368, 1
    %v1410 = vrot.slane %v1369, 1
    %v1411 = vrot.slane %v1370, 1
    %v1412 = vrot.slane %v1371, 1
    %v1413 = vsel %vm137, %v1411, %v1412
    %v1414 = vsel %vm137, %v1410, %v1411
    %v1415 = vsel %vm137, %v1409, %v1410
    %v1416 = vsel %vm137, %v1412, %v1409
    %v1417 = vsel %vm146, 0.0, %v1415
    %v1418 = vsel %vm147, 0.0, %v1414
    %v1419 = vsel %vm148, 0.0, %v1413
    %v1420 = vsel %vm149, 0.0, %v1416
    %1425 = vrot.lane.b32.xlu0 %v1368, 64
    %v1426 = vpop.permute.xlu0 %1425
    %1427 = vrot.lane.b32.xlu0 %v1369, 64
    %v1428 = vpop.permute.xlu0 %1427
    %1429 = vrot.lane.b32.xlu0 %v1370, 64
    %v1430 = vpop.permute.xlu0 %1429
    %1431 = vrot.lane.b32.xlu0 %v1371, 64
    %v1432 = vpop.permute.xlu0 %1431
    %v1437 = vsel %vm393, %v1405, %v1426
    %v1438 = vsel %vm393, %v1406, %v1428
    %v1439 = vsel %vm393, %v1407, %v1430
    %v1440 = vsel %vm393, %v1408, %v1432
    %v1442 = vsel %vm393, %v1417, 0
    %v1445 = vsel %vm393, %v1418, 0
    %v1448 = vsel %vm393, %v1419, 0
    %v1451 = vsel %vm393, %v1420, 0
    %1453 = vmatpush.msra.mxu0 %v1388
    %1454 = vmatpush.msra.mxu0 %v1387
    %1455 = vmatpush.msra.mxu0 %v1386
    %1456 = vmatpush.msra.mxu0 %v1385
    %1457 = vmatpush.msra.mxu0 %v1384
    %1458 = vmatpush.msra.mxu0 %v1383
    %1459 = vmatpush.msra.mxu0 %v1382
    %1460 = vmatpush.msra.mxu0 %v1381
    %1461 = vmatpush.msra.mxu0 %v1380
    %1462 = vmatpush.msra.mxu0 %v1379
    %1463 = vmatpush.msra.mxu0 %v1378
    %1464 = vmatpush.msra.mxu0 %v1377
    %1465 = vmatpush.msra.mxu0 %v1376
    %1466 = vmatpush.msra.mxu0 %v1375
    %1467 = vmatpush.msra.mxu0 %v1374
    %1468 = vmatpush.msra.mxu0 %v1373
    %1469 = vmatmul.f32.gmra.mxu0 %v1437
    %v1470 = vpop.f32.mrf.mxu0
    %v1471 = vadd.f32 0.0, %v1470
    %1472 = vmatmul.f32.gmra.mxu0 %v1438
    %v1473 = vpop.f32.mrf.mxu0
    %v1474 = vadd.f32 0.0, %v1473
    %1475 = vmatmul.f32.gmra.mxu0 %v1439
    %v1476 = vpop.f32.mrf.mxu0
    %v1477 = vadd.f32 0.0, %v1476
    %1478 = vmatmul.f32.gmra.mxu0 %v1440
    %v1479 = vpop.f32.mrf.mxu0
    %v1480 = vadd.f32 0.0, %v1479
    %1481 = vdwg.mxu0
    %1482 = vmatpush.msra.mxu0 0.0
    %1483 = vmatpush.msra.mxu0 0.0
    %1484 = vmatpush.msra.mxu0 0.0
    %1485 = vmatpush.msra.mxu0 0.0
    %1486 = vmatpush.msra.mxu0 0.0
    %1487 = vmatpush.msra.mxu0 0.0
    %1488 = vmatpush.msra.mxu0 0.0
    %1489 = vmatpush.msra.mxu0 0.0
    %1490 = vmatpush.msra.mxu0 %v1396
    %1491 = vmatpush.msra.mxu0 %v1395
    %1492 = vmatpush.msra.mxu0 %v1394
    %1493 = vmatpush.msra.mxu0 %v1393
    %1494 = vmatpush.msra.mxu0 %v1392
    %1495 = vmatpush.msra.mxu0 %v1391
    %1496 = vmatpush.msra.mxu0 %v1390
    %1497 = vmatpush.msra.mxu0 %v1389
    %1498 = vmatmul.f32.gmra.mxu0 %v1442
    %v1499 = vpop.f32.mrf.mxu0
    %v1500 = vadd.f32 %v1471, %v1499
    %1501 = vmatmul.f32.gmra.mxu0 %v1445
    %v1502 = vpop.f32.mrf.mxu0
    %v1503 = vadd.f32 %v1474, %v1502
    %1504 = vmatmul.f32.gmra.mxu0 %v1448
    %v1505 = vpop.f32.mrf.mxu0
    %v1506 = vadd.f32 %v1477, %v1505
    %1507 = vmatmul.f32.gmra.mxu0 %v1451
    %v1508 = vpop.f32.mrf.mxu0
    %v1509 = vadd.f32 %v1480, %v1508
    %1510 = vdwg.mxu0
    %v1511 = vadd.f32 %v1172, %v1500
    %v1512 = vadd.f32 %v1173, %v1503
    %v1513 = vadd.f32 %v1174, %v1506
    %v1514 = vadd.f32 %v1175, %v1509
    %s1515 = scalar_lea.vmem %s5, 3
    %v1516 = vld [vmem:[%s1515] sm:$0x1]
    %v1518 = vperm.slane %v1516, 0
    %v1520 = vadd.f32 %v1511, %v1518
    %v1521 = vadd.f32 %v1512, %v1518
    %v1522 = vadd.f32 %v1513, %v1518
    %v1523 = vadd.f32 %v1514, %v1518
    %v1524 = vld [vmem:[%s6] sm:$0xff]
    %v1525 = vld [vmem:[%s6 + $0x8] sm:$0xff]
    %v1526 = vld [vmem:[%s7] sm:$0xff]
    %v1527 = vld [vmem:[%s7 + $0x8] sm:$0xff]
    %1529 = vset.pattern.permute.xlu0 0
    %1530 = vperm.xlu0 %1529, %v1526
    %v1531 = vpop.permute.xlu0 %1530
    %1534 = vset.pattern.permute.xlu0 0
    %1535 = vperm.xlu0 %1534, %v1527
    %v1536 = vpop.permute.xlu0 %1535
    %vm1538 = vcmask 130048
    %v1540 = vsel %vm1538, %v1524, 0
    %v1543 = vsel %vm1538, %v1525, 0
    %1545 = vmatpush.msra.mxu0 0.0
    %1546 = vmatpush.msra.mxu0 0.0
    %1547 = vmatpush.msra.mxu0 0.0
    %1548 = vmatpush.msra.mxu0 0.0
    %1549 = vmatpush.msra.mxu0 0.0
    %1550 = vmatpush.msra.mxu0 0.0
    %1551 = vmatpush.msra.mxu0 0.0
    %1552 = vmatpush.msra.mxu0 0.0
    %1553 = vmatpush.msra.mxu0 0.0
    %1554 = vmatpush.msra.mxu0 0.0
    %1555 = vmatpush.msra.mxu0 0.0
    %1556 = vmatpush.msra.mxu0 0.0
    %1557 = vmatpush.msra.mxu0 0.0
    %1558 = vmatpush.msra.mxu0 0.0
    %1559 = vmatpush.msra.mxu0 %v1521
    %1560 = vmatpush.msra.mxu0 %v1520
    %1561 = vmatmul.f32.gmra.mxu0 %v1540
    %v1562 = vpop.f32.mrf.mxu0
    %v1563 = vadd.f32 %v1531, %v1562
    %1564 = vmatmul.f32.gmra.mxu0 %v1543
    %v1565 = vpop.f32.mrf.mxu0
    %v1566 = vadd.f32 %v1536, %v1565
    %1567 = vdwg.mxu0
    %1568 = vmatpush.msra.mxu0 0.0
    %1569 = vmatpush.msra.mxu0 0.0
    %1570 = vmatpush.msra.mxu0 0.0
    %1571 = vmatpush.msra.mxu0 0.0
    %1572 = vmatpush.msra.mxu0 0.0
    %1573 = vmatpush.msra.mxu0 0.0
    %1574 = vmatpush.msra.mxu0 0.0
    %1575 = vmatpush.msra.mxu0 0.0
    %1576 = vmatpush.msra.mxu0 0.0
    %1577 = vmatpush.msra.mxu0 0.0
    %1578 = vmatpush.msra.mxu0 0.0
    %1579 = vmatpush.msra.mxu0 0.0
    %1580 = vmatpush.msra.mxu0 0.0
    %1581 = vmatpush.msra.mxu0 0.0
    %1582 = vmatpush.msra.mxu0 %v1523
    %1583 = vmatpush.msra.mxu0 %v1522
    %1584 = vmatmul.f32.gmra.mxu0 %v1540
    %v1585 = vpop.f32.mrf.mxu0
    %v1586 = vadd.f32 %v1531, %v1585
    %1587 = vmatmul.f32.gmra.mxu0 %v1543
    %v1588 = vpop.f32.mrf.mxu0
    %v1589 = vadd.f32 %v1536, %v1588
    %1590 = vdwg.mxu0
    %v1591 = vmax.f32 %v1563, 0.0
    %v1592 = vmax.f32 %v1566, 0.0
    %v1593 = vmax.f32 %v1586, 0.0
    %v1594 = vmax.f32 %v1589, 0.0
    %v1595 = vadd.f32 %v1520, %v1591
    %v1596 = vadd.f32 %v1521, %v1592
    %v1597 = vadd.f32 %v1522, %v1593
    %v1598 = vadd.f32 %v1523, %v1594
    %v1599 = vld [vmem:[%s8] sm:$0xff]
    %v1600 = vld [vmem:[%s8 + $0x8] sm:$0xf]
    %v1601 = vrot.slane %v1595, 7
    %v1602 = vrot.slane %v1596, 7
    %v1603 = vrot.slane %v1597, 7
    %v1604 = vrot.slane %v1598, 7
    %v1605 = vsel %vm116, %v1603, %v1604
    %v1606 = vsel %vm116, %v1602, %v1603
    %v1607 = vsel %vm116, %v1601, %v1602
    %v1608 = vsel %vm116, %v1604, %v1601
    %v1609 = vsel %vm125, 0.0, %v1608
    %v1610 = vsel %vm126, 0.0, %v1607
    %v1611 = vsel %vm127, 0.0, %v1606
    %v1612 = vsel %vm128, 0.0, %v1605
    %v1613 = vrot.slane %v1595, 1
    %v1614 = vrot.slane %v1596, 1
    %v1615 = vrot.slane %v1597, 1
    %v1616 = vrot.slane %v1598, 1
    %v1617 = vsel %vm137, %v1615, %v1616
    %v1618 = vsel %vm137, %v1614, %v1615
    %v1619 = vsel %vm137, %v1613, %v1614
    %v1620 = vsel %vm137, %v1616, %v1613
    %v1621 = vsel %vm146, 0.0, %v1619
    %v1622 = vsel %vm147, 0.0, %v1618
    %v1623 = vsel %vm148, 0.0, %v1617
    %v1624 = vsel %vm149, 0.0, %v1620
    %1629 = vrot.lane.b32.xlu0 %v1595, 4
    %v1630 = vpop.permute.xlu0 %1629
    %1631 = vrot.lane.b32.xlu0 %v1596, 4
    %v1632 = vpop.permute.xlu0 %1631
    %1633 = vrot.lane.b32.xlu0 %v1597, 4
    %v1634 = vpop.permute.xlu0 %1633
    %1635 = vrot.lane.b32.xlu0 %v1598, 4
    %v1636 = vpop.permute.xlu0 %1635
    %1645 = vrot.lane.b32.xlu0 %v1621, 8
    %v1646 = vpop.permute.xlu0 %1645
    %1647 = vrot.lane.b32.xlu0 %v1622, 8
    %v1648 = vpop.permute.xlu0 %1647
    %1649 = vrot.lane.b32.xlu0 %v1623, 8
    %v1650 = vpop.permute.xlu0 %1649
    %1651 = vrot.lane.b32.xlu0 %v1624, 8
    %v1652 = vpop.permute.xlu0 %1651
    %v1657 = vsel %vm186, %v1609, %v1630
    %v1658 = vsel %vm186, %v1610, %v1632
    %v1659 = vsel %vm186, %v1611, %v1634
    %v1660 = vsel %vm186, %v1612, %v1636
    %v1661 = vsel %vm191, %v1657, %v1646
    %v1662 = vsel %vm191, %v1658, %v1648
    %v1663 = vsel %vm191, %v1659, %v1650
    %v1664 = vsel %vm191, %v1660, %v1652
    %v1666 = vsel %vm196, %v1661, 0
    %v1669 = vsel %vm196, %v1662, 0
    %v1672 = vsel %vm196, %v1663, 0
    %v1675 = vsel %vm196, %v1664, 0
    %v1678 = vsel %vm209, %v1600, 0
    %1680 = vmatpush.msra.mxu0 0.0
    %1681 = vmatpush.msra.mxu0 0.0
    %1682 = vmatpush.msra.mxu0 0.0
    %1683 = vmatpush.msra.mxu0 0.0
    %1684 = vmatpush.msra.mxu0 0.0
    %1685 = vmatpush.msra.mxu0 0.0
    %1686 = vmatpush.msra.mxu0 0.0
    %1687 = vmatpush.msra.mxu0 0.0
    %1688 = vmatpush.msra.mxu0 0.0
    %1689 = vmatpush.msra.mxu0 0.0
    %1690 = vmatpush.msra.mxu0 0.0
    %1691 = vmatpush.msra.mxu0 0.0
    %1692 = vmatpush.msra.mxu0 0.0
    %1693 = vmatpush.msra.mxu0 0.0
    %1694 = vmatpush.msra.mxu0 %v1678
    %1695 = vmatpush.msra.mxu0 %v1599
    %1696 = vmatmul.f32.gmra.mxu0 %v1666
    %v1697 = vpop.f32.mrf.mxu0
    %v1698 = vadd.f32 0.0, %v1697
    %1699 = vmatmul.f32.gmra.mxu0 %v1669
    %v1700 = vpop.f32.mrf.mxu0
    %v1701 = vadd.f32 0.0, %v1700
    %1702 = vmatmul.f32.gmra.mxu0 %v1672
    %v1703 = vpop.f32.mrf.mxu0
    %v1704 = vadd.f32 0.0, %v1703
    %1705 = vmatmul.f32.gmra.mxu0 %v1675
    %v1706 = vpop.f32.mrf.mxu0
    %v1707 = vadd.f32 0.0, %v1706
    %1708 = vdwg.mxu0
    %v1709 = vld [vmem:[%s9] sm:$0x1]
    %v1710 = vld [vmem:[%s10] sm:$0x1]
    %1711 = vmatpush.msra.mxu0 0.0
    %1712 = vmatpush.msra.mxu0 0.0
    %1713 = vmatpush.msra.mxu0 0.0
    %1714 = vmatpush.msra.mxu0 0.0
    %1715 = vmatpush.msra.mxu0 0.0
    %1716 = vmatpush.msra.mxu0 0.0
    %1717 = vmatpush.msra.mxu0 0.0
    %1718 = vmatpush.msra.mxu0 0.0
    %1719 = vmatpush.msra.mxu0 0.0
    %1720 = vmatpush.msra.mxu0 0.0
    %1721 = vmatpush.msra.mxu0 0.0
    %1722 = vmatpush.msra.mxu0 0.0
    %1723 = vmatpush.msra.mxu0 %v1707
    %1724 = vmatpush.msra.mxu0 %v1704
    %1725 = vmatpush.msra.mxu0 %v1701
    %1726 = vmatpush.msra.mxu0 %v1698
    %1727 = vmatmul.f32.gmra.mxu0 %v246
    %v1728 = vpop.f32.mrf.mxu0
    %v1729 = vadd.f32 0.0, %v1728
    %1730 = vdwg.mxu0
    %v1731 = vmul.f32 %v1729, 0.03125
    %v1732 = vperm.slane %v1731, 0
    %v1733 = vsub.f32 %v1698, %v1732
    %v1734 = vsub.f32 %v1701, %v1732
    %v1735 = vsub.f32 %v1704, %v1732
    %v1736 = vsub.f32 %v1707, %v1732
    %v1737 = vmul.f32 %v1733, %v1733
    %v1738 = vmul.f32 %v1734, %v1734
    %v1739 = vmul.f32 %v1735, %v1735
    %v1740 = vmul.f32 %v1736, %v1736
    %1741 = vmatpush.msra.mxu0 0.0
    %1742 = vmatpush.msra.mxu0 0.0
    %1743 = vmatpush.msra.mxu0 0.0
    %1744 = vmatpush.msra.mxu0 0.0
    %1745 = vmatpush.msra.mxu0 0.0
    %1746 = vmatpush.msra.mxu0 0.0
    %1747 = vmatpush.msra.mxu0 0.0
    %1748 = vmatpush.msra.mxu0 0.0
    %1749 = vmatpush.msra.mxu0 0.0
    %1750 = vmatpush.msra.mxu0 0.0
    %1751 = vmatpush.msra.mxu0 0.0
    %1752 = vmatpush.msra.mxu0 0.0
    %1753 = vmatpush.msra.mxu0 %v1740
    %1754 = vmatpush.msra.mxu0 %v1739
    %1755 = vmatpush.msra.mxu0 %v1738
    %1756 = vmatpush.msra.mxu0 %v1737
    %1757 = vmatmul.f32.gmra.mxu0 %v246
    %v1758 = vpop.f32.mrf.mxu0
    %v1759 = vadd.f32 0.0, %v1758
    %1760 = vdwg.mxu0
    %v1761 = vmul.f32 %v1759, 0.03125
    %v1762 = vadd.f32 %v1761, 1e-05
    %v1763 = vrsqrt.pop %v1762
    %v1764 = vmul.f32 %v1763, %v1762
    %v1765 = vmul.f32 %v1764, %v1763
    %v1766 = vmul.f32 0.5, %v1765
    %v1767 = vsub.f32 1.5, %v1766
    %v1768 = vmul.f32 %v1763, %v1767
    %vm1769 = vweird.f32 %v1762
    %vm1770 = vweird.f32 %v1763
    %vm1771 = vmor %vm1769, %vm1770
    %v1772 = vsel %vm1771, %v1763, %v1768
    %v1773 = vmul.f32 %v1709, %v1772
    %v1775 = vperm.slane %v1773, 0
    %v1777 = vmul.f32 %v1733, %v1775
    %v1778 = vmul.f32 %v1734, %v1775
    %v1779 = vmul.f32 %v1735, %v1775
    %v1780 = vmul.f32 %v1736, %v1775
    %v1782 = vperm.slane %v1710, 0
    %v1784 = vadd.f32 %v1777, %v1782
    %v1785 = vadd.f32 %v1778, %v1782
    %v1786 = vadd.f32 %v1779, %v1782
    %v1787 = vadd.f32 %v1780, %v1782
    %v1788 = vmax.f32 %v1784, 0.0
    %v1789 = vmax.f32 %v1785, 0.0
    %v1790 = vmax.f32 %v1786, 0.0
    %v1791 = vmax.f32 %v1787, 0.0
    %v1792 = vld [vmem:[%s11] sm:$0xff]
    %v1793 = vld [vmem:[%s11 + $0x8] sm:$0xff]
    %v1794 = vld [vmem:[%s11 + $0x10] sm:$0xff]
    %v1795 = vld [vmem:[%s11 + $0x18] sm:$0xff]
    %v1796 = vld [vmem:[%s11 + $0x20] sm:$0xff]
    %v1797 = vld [vmem:[%s11 + $0x28] sm:$0xff]
    %v1798 = vld [vmem:[%s11 + $0x30] sm:$0xff]
    %v1799 = vld [vmem:[%s11 + $0x38] sm:$0xff]
    %v1800 = vld [vmem:[%s11 + $0x40] sm:$0xff]
    %v1801 = vld [vmem:[%s11 + $0x48] sm:$0xff]
    %v1802 = vld [vmem:[%s11 + $0x50] sm:$0xff]
    %v1803 = vld [vmem:[%s11 + $0x58] sm:$0xff]
    %v1804 = vld [vmem:[%s11 + $0x60] sm:$0xff]
    %v1805 = vld [vmem:[%s11 + $0x68] sm:$0xff]
    %v1806 = vld [vmem:[%s11 + $0x70] sm:$0xff]
    %v1807 = vld [vmem:[%s11 + $0x78] sm:$0xff]
    %v1808 = vld [vmem:[%s11 + $0x80] sm:$0xff]
    %v1809 = vld [vmem:[%s11 + $0x88] sm:$0xff]
    %v1810 = vld [vmem:[%s11 + $0x90] sm:$0xff]
    %v1811 = vld [vmem:[%s11 + $0x98] sm:$0xff]
    %v1812 = vld [vmem:[%s11 + $0xa0] sm:$0xff]
    %v1813 = vld [vmem:[%s11 + $0xa8] sm:$0xff]
    %v1814 = vld [vmem:[%s11 + $0xb0] sm:$0xff]
    %v1815 = vld [vmem:[%s11 + $0xb8] sm:$0xff]
    %v1816 = vrot.slane %v1788, 7
    %v1817 = vrot.slane %v1789, 7
    %v1818 = vrot.slane %v1790, 7
    %v1819 = vrot.slane %v1791, 7
    %v1820 = vsel %vm116, %v1818, %v1819
    %v1821 = vsel %vm116, %v1817, %v1818
    %v1822 = vsel %vm116, %v1816, %v1817
    %v1823 = vsel %vm116, %v1819, %v1816
    %v1824 = vsel %vm125, 0.0, %v1823
    %v1825 = vsel %vm126, 0.0, %v1822
    %v1826 = vsel %vm127, 0.0, %v1821
    %v1827 = vsel %vm128, 0.0, %v1820
    %v1828 = vrot.slane %v1788, 1
    %v1829 = vrot.slane %v1789, 1
    %v1830 = vrot.slane %v1790, 1
    %v1831 = vrot.slane %v1791, 1
    %v1832 = vsel %vm137, %v1830, %v1831
    %v1833 = vsel %vm137, %v1829, %v1830
    %v1834 = vsel %vm137, %v1828, %v1829
    %v1835 = vsel %vm137, %v1831, %v1828
    %v1836 = vsel %vm146, 0.0, %v1834
    %v1837 = vsel %vm147, 0.0, %v1833
    %v1838 = vsel %vm148, 0.0, %v1832
    %v1839 = vsel %vm149, 0.0, %v1835
    %1844 = vrot.lane.b32.xlu0 %v1788, 64
    %v1845 = vpop.permute.xlu0 %1844
    %1846 = vrot.lane.b32.xlu0 %v1789, 64
    %v1847 = vpop.permute.xlu0 %1846
    %1848 = vrot.lane.b32.xlu0 %v1790, 64
    %v1849 = vpop.permute.xlu0 %1848
    %1850 = vrot.lane.b32.xlu0 %v1791, 64
    %v1851 = vpop.permute.xlu0 %1850
    %v1856 = vsel %vm393, %v1824, %v1845
    %v1857 = vsel %vm393, %v1825, %v1847
    %v1858 = vsel %vm393, %v1826, %v1849
    %v1859 = vsel %vm393, %v1827, %v1851
    %v1860 = vld [vmem:[%s12] sm:$0x1]
    %v1862 = vperm.slane %v1860, 0
    %v1865 = vsel %vm393, %v1836, 0
    %v1868 = vsel %vm393, %v1837, 0
    %v1871 = vsel %vm393, %v1838, 0
    %v1874 = vsel %vm393, %v1839, 0
    %1876 = vmatpush.msra.mxu0 %v1807
    %1877 = vmatpush.msra.mxu0 %v1806
    %1878 = vmatpush.msra.mxu0 %v1805
    %1879 = vmatpush.msra.mxu0 %v1804
    %1880 = vmatpush.msra.mxu0 %v1803
    %1881 = vmatpush.msra.mxu0 %v1802
    %1882 = vmatpush.msra.mxu0 %v1801
    %1883 = vmatpush.msra.mxu0 %v1800
    %1884 = vmatpush.msra.mxu0 %v1799
    %1885 = vmatpush.msra.mxu0 %v1798
    %1886 = vmatpush.msra.mxu0 %v1797
    %1887 = vmatpush.msra.mxu0 %v1796
    %1888 = vmatpush.msra.mxu0 %v1795
    %1889 = vmatpush.msra.mxu0 %v1794
    %1890 = vmatpush.msra.mxu0 %v1793
    %1891 = vmatpush.msra.mxu0 %v1792
    %1892 = vmatmul.f32.gmra.mxu0 %v1856
    %v1893 = vpop.f32.mrf.mxu0
    %v1894 = vadd.f32 %v1862, %v1893
    %1895 = vmatmul.f32.gmra.mxu0 %v1857
    %v1896 = vpop.f32.mrf.mxu0
    %v1897 = vadd.f32 %v1862, %v1896
    %1898 = vmatmul.f32.gmra.mxu0 %v1858
    %v1899 = vpop.f32.mrf.mxu0
    %v1900 = vadd.f32 %v1862, %v1899
    %1901 = vmatmul.f32.gmra.mxu0 %v1859
    %v1902 = vpop.f32.mrf.mxu0
    %v1903 = vadd.f32 %v1862, %v1902
    %1904 = vdwg.mxu0
    %1905 = vmatpush.msra.mxu0 0.0
    %1906 = vmatpush.msra.mxu0 0.0
    %1907 = vmatpush.msra.mxu0 0.0
    %1908 = vmatpush.msra.mxu0 0.0
    %1909 = vmatpush.msra.mxu0 0.0
    %1910 = vmatpush.msra.mxu0 0.0
    %1911 = vmatpush.msra.mxu0 0.0
    %1912 = vmatpush.msra.mxu0 0.0
    %1913 = vmatpush.msra.mxu0 %v1815
    %1914 = vmatpush.msra.mxu0 %v1814
    %1915 = vmatpush.msra.mxu0 %v1813
    %1916 = vmatpush.msra.mxu0 %v1812
    %1917 = vmatpush.msra.mxu0 %v1811
    %1918 = vmatpush.msra.mxu0 %v1810
    %1919 = vmatpush.msra.mxu0 %v1809
    %1920 = vmatpush.msra.mxu0 %v1808
    %1921 = vmatmul.f32.gmra.mxu0 %v1865
    %v1922 = vpop.f32.mrf.mxu0
    %v1923 = vadd.f32 %v1894, %v1922
    %1924 = vmatmul.f32.gmra.mxu0 %v1868
    %v1925 = vpop.f32.mrf.mxu0
    %v1926 = vadd.f32 %v1897, %v1925
    %1927 = vmatmul.f32.gmra.mxu0 %v1871
    %v1928 = vpop.f32.mrf.mxu0
    %v1929 = vadd.f32 %v1900, %v1928
    %1930 = vmatmul.f32.gmra.mxu0 %v1874
    %v1931 = vpop.f32.mrf.mxu0
    %v1932 = vadd.f32 %v1903, %v1931
    %1933 = vdwg.mxu0
    %1934 = vst [vmem:[#allocation2] sm:$0xff] %v1923
    %1935 = vst [vmem:[#allocation2 + $0x8] sm:$0xff] %v1926
    %1936 = vst [vmem:[#allocation2 + $0x10] sm:$0xff] %v1929
    %1937 = vst [vmem:[#allocation2 + $0x18] sm:$0xff] %v1932
    // Predicated region
    $region54: #{static_embedding_forward.1} parent=1 // pred_check
      _
    $region55: #{static_embedding_forward.1} parent=1 // pred_check_branch
      %1939 = sbr.rel (0) target = $region57
    $region56: #{static_embedding_forward.1} parent=1 // pred_region
      %1941 = vsyncadd [#allocation3], 0
      %s1942 = sshll.u32 [#allocation2], 4
      %s1943 = int_to_ptr.vmem [resolvable:$true] %s1942
      %s1944 = sshll.u32 %s13, 4
      %s1945 = int_to_ptr.hbm [resolvable:$true] %s1944
      %1950 = dma.vmem_to_hbm [thread:$0]  %s1943, 512, %s1945, [#allocation3], 128, 128, 8
    $region57: #{static_embedding_forward.1} parent=1 // pred_fallthru
      _
    // Predicated region
    $region58: #{static_embedding_forward.1} parent=1 // pred_check
      _
    $region59: #{static_embedding_forward.1} parent=1 // pred_check_branch
      %1952 = sbr.rel (0) target = $region61
    $region60: #{static_embedding_forward.1} parent=1 // pred_region
      %1954 = dma.done [#allocation3], 512
    $region61: #{static_embedding_forward.1} parent=1 // pred_fallthru
      _
    %1955 = vsyncpa [#allocation3], 1

</llo_original>
